<compile_context>
chip_gen: v5e
topology: v5e:2x2
jax: 0.10.0
libtpu: 0.0.40
codegen_flags: <defaults>
</compile_context>

<pallas_src>
import jax
import jax.numpy as jnp
from jax.experimental import pallas as pl
from jax.experimental.pallas import tpu as pltpu

# ----------------------------- model dimensions -----------------------------
N = 16            # nodes
IN_CH = 8         # in_channels
HIDDEN = 8        # hidden_channels (per-head)
HEADS = 4         # conv1 heads
OUT_CH = 4        # out_channels
HC = HIDDEN * HEADS   # 32

NEG_SLOPE = 0.2   # GATv2 leaky_relu slope
LN_EPS = 1e-5     # nn.LayerNorm eps

# ------------------------ packed-parameter slab layout -----------------------
# w1 slab [16, 768]: rows 0:8 weights, row 8 bias.
W1_XRW, W1_XL, W1_RES, W1_COLS, W1_ROWS = 0, 512, 640, 768, 16
# w2 slab [40, 256]: rows 0:32 weights, row 32 bias.
W2_XRW, W2_XL, W2_RES, W2_SKIP, W2_COLS, W2_ROWS = 0, 128, 136, 144, 256, 40
# const slab [640, 64]
C_ROWS, C_COLS = 640, 64
C_A1_R = 0        # rows [0,512)   cols [0,64)   structured att1 matrix
C_A2_R = 512      # rows [512,640) cols [0,16)   structured att2 matrix
C_BLK_R = 512     # rows [512,576) cols [16,48)  block-diag head mask
C_OW_R = 576      # rows [576,584) cols [16,20)  out_layer weight
C_RHS = 16        # column where the "right hand" region starts
C_C1B_R, C_N1G_R, C_N1B_R = 584, 585, 586
C_C2B_R, C_N2G_R, C_N2B_R = 587, 588, 589
C_OB_R = 590


# ----------------------------- math helpers ----------------------------------
def _leaky_relu(x):
    return jnp.where(x > 0, x, NEG_SLOPE * x)


def _elu(x):
    return jnp.where(x > 0, x, jnp.exp(jnp.minimum(x, 0.0)) - 1.0)


def _layer_norm(x, gamma, beta):
    mu = jnp.mean(x, axis=-1, keepdims=True)
    var = jnp.mean((x - mu) ** 2, axis=-1, keepdims=True)
    return (x - mu) * jax.lax.rsqrt(var + LN_EPS) * gamma + beta


def _flatten_rows(m, n_rows):
    """Row-major flatten [n_rows, F] -> [1, n_rows*F] via lane concat
    (avoids sublane<->lane reshapes inside the kernel)."""
    return jnp.concatenate([m[j:j + 1, :] for j in range(n_rows)], axis=1)


# ----------------------------- the Pallas kernel -----------------------------
def gat_model_kernel(x_ref, adjw_ref, w1_ref, w2_ref, c_ref, out_ref):
    f32 = jnp.float32
    x = x_ref[...]                                   # [N, IN_CH]
    adj_w = adjw_ref[...]                            # [N, HEADS*N] (adj tiled per head)

    # =============== layer 1: GATv2, 4 heads, concat ===============
    # fused projection: [lin_r tiled per source | lin_l | residual1]
    proj1 = (jnp.dot(x, w1_ref[0:IN_CH, :], preferred_element_type=f32)
             + w1_ref[IN_CH:IN_CH + 1, :])           # [N, 768]
    xr1w = proj1[:, W1_XRW:W1_XRW + N * HC]          # [N, N*HC]  col j*HC+k = (lin_r x)[i,k]
    xl1 = proj1[:, W1_XL:W1_XL + HC]                 # [N, HC]
    res1 = proj1[:, W1_RES:W1_RES + HC]              # [N, HC]

    # all heads / all (target, source) pairs at once, lane-dense [16, 512]
    xl1_flat = _flatten_rows(xl1, N)                 # [1, N*HC]
    t1 = _leaky_relu(xr1w + xl1_flat)

    # all-head logits with a single MXU matmul: e1[i, h*N + j]
    e1 = jnp.dot(t1, c_ref[C_A1_R:C_A1_R + N * HC, 0:HEADS * N],
                 preferred_element_type=f32)         # [N, HEADS*N]
    e1 = jnp.where(adj_w > 0.0, e1, -1e30)

    # per-head masked softmax over sources (masked exps underflow to 0)
    alphas = []
    for h in range(HEADS):
        eh = e1[:, h * N:(h + 1) * N]
        eh = eh - jnp.max(eh, axis=-1, keepdims=True)
        ph = jnp.exp(eh)
        alphas.append(ph / jnp.sum(ph, axis=-1, keepdims=True))
    alpha1 = jnp.concatenate(alphas, axis=1)         # [N, HEADS*N]

    # one block-diagonal aggregation matmul -> concatenated head outputs [N, HC]
    blk = c_ref[C_BLK_R:C_BLK_R + HEADS * N, C_RHS:C_RHS + HC]
    xl_bd = jnp.concatenate([xl1] * HEADS, axis=0) * blk
    h1 = (jnp.dot(alpha1, xl_bd, preferred_element_type=f32)
          + c_ref[C_C1B_R:C_C1B_R + 1, C_RHS:C_RHS + HC])

    h1 = _layer_norm(h1,
                     c_ref[C_N1G_R:C_N1G_R + 1, C_RHS:C_RHS + HC],
                     c_ref[C_N1B_R:C_N1B_R + 1, C_RHS:C_RHS + HC])
    h1 = _elu(h1 + res1)
    # F.dropout(p=0.6): eval-mode identity
    # skip_input = h1

    # =============== layer 2: GATv2, 1 head, mean == identity ===============
    proj2 = (jnp.dot(h1, w2_ref[0:HC, :], preferred_element_type=f32)
             + w2_ref[HC:HC + 1, :])                 # [N, 256]
    xr2w = proj2[:, W2_XRW:W2_XRW + N * HIDDEN]      # [N, N*HIDDEN]
    xl2 = proj2[:, W2_XL:W2_XL + HIDDEN]             # [N, HIDDEN]
    res2 = proj2[:, W2_RES:W2_RES + HIDDEN]
    skip = proj2[:, W2_SKIP:W2_SKIP + HIDDEN]

    xl2_flat = _flatten_rows(xl2, N)                 # [1, N*HIDDEN]
    t2 = _leaky_relu(xr2w + xl2_flat)                # [N, 128]
    e2 = jnp.dot(t2, c_ref[C_A2_R:C_A2_R + N * HIDDEN, 0:N],
                 preferred_element_type=f32)         # [N, N]
    e2 = jnp.where(adj_w[:, 0:N] > 0.0, e2, -1e30)
    e2 = e2 - jnp.max(e2, axis=-1, keepdims=True)
    p2 = jnp.exp(e2)
    alpha2 = p2 / jnp.sum(p2, axis=-1, keepdims=True)
    h2 = (jnp.dot(alpha2, xl2, preferred_element_type=f32)
          + c_ref[C_C2B_R:C_C2B_R + 1, C_RHS:C_RHS + HIDDEN])

    h2 = _layer_norm(h2,
                     c_ref[C_N2G_R:C_N2G_R + 1, C_RHS:C_RHS + HIDDEN],
                     c_ref[C_N2B_R:C_N2B_R + 1, C_RHS:C_RHS + HIDDEN])
    h2 = _elu(h2 + res2)
    # F.dropout(p=0.6): eval-mode identity
    h2 = h2 + skip

    # =============== output head ===============
    out_ref[...] = (jnp.dot(h2, c_ref[C_OW_R:C_OW_R + HIDDEN, C_RHS:C_RHS + OUT_CH],
                            preferred_element_type=f32)
                    + c_ref[C_OB_R:C_OB_R + 1, C_RHS:C_RHS + OUT_CH])


# ----------------------------- host-side packing ------------------------------
def pack_params(p):
    """Pack the 24 raw parameter tensors into 3 dense f32 slabs."""
    (c1_wl, c1_bl, c1_wr, c1_br, c1_att, c1_b,
     n1_g, n1_b, r1_w, r1_b,
     c2_wl, c2_bl, c2_wr, c2_br, c2_att, c2_b,
     n2_g, n2_b, r2_w, r2_b,
     sk_w, sk_b, o_w, o_b) = p
    f32 = jnp.float32

    w1 = jnp.zeros((W1_ROWS, W1_COLS), f32)
    w1 = w1.at[0:IN_CH, W1_XRW:W1_XRW + N * HC].set(jnp.tile(c1_wr, (1, N)))
    w1 = w1.at[0:IN_CH, W1_XL:W1_XL + HC].set(c1_wl)
    w1 = w1.at[0:IN_CH, W1_RES:W1_RES + HC].set(r1_w)
    w1 = w1.at[IN_CH, W1_XRW:W1_XRW + N * HC].set(jnp.tile(c1_br, (1, N))[0])
    w1 = w1.at[IN_CH, W1_XL:W1_XL + HC].set(c1_bl[0])
    w1 = w1.at[IN_CH, W1_RES:W1_RES + HC].set(r1_b[0])

    w2 = jnp.zeros((W2_ROWS, W2_COLS), f32)
    w2 = w2.at[0:HC, W2_XRW:W2_XRW + N * HIDDEN].set(jnp.tile(c2_wr, (1, N)))
    w2 = w2.at[0:HC, W2_XL:W2_XL + HIDDEN].set(c2_wl)
    w2 = w2.at[0:HC, W2_RES:W2_RES + HIDDEN].set(r2_w)
    w2 = w2.at[0:HC, W2_SKIP:W2_SKIP + HIDDEN].set(sk_w)
    w2 = w2.at[HC, W2_XRW:W2_XRW + N * HIDDEN].set(jnp.tile(c2_br, (1, N))[0])
    w2 = w2.at[HC, W2_XL:W2_XL + HIDDEN].set(c2_bl[0])
    w2 = w2.at[HC, W2_RES:W2_RES + HIDDEN].set(r2_b[0])
    w2 = w2.at[HC, W2_SKIP:W2_SKIP + HIDDEN].set(sk_b[0])

    # structured attention matrices:
    #   a1[j*HC + h*C + c, h*N + j] = att1[h, c]
    #   a2[j*C + c, j]              = att2[0, c]
    eye_h = jnp.eye(HEADS, dtype=f32)
    eye_n = jnp.eye(N, dtype=f32)
    a1 = jnp.einsum('hc,hk,jl->jhckl', c1_att, eye_h, eye_n).reshape(N * HC, HEADS * N)
    a2 = jnp.einsum('c,jl->jcl', c2_att[0], eye_n).reshape(N * HIDDEN, N)
    blk = jnp.kron(eye_h, jnp.ones((N, HIDDEN), f32))     # [HEADS*N, HC]

    cs = jnp.zeros((C_ROWS, C_COLS), f32)
    cs = cs.at[C_A1_R:C_A1_R + N * HC, 0:HEADS * N].set(a1)
    cs = cs.at[C_A2_R:C_A2_R + N * HIDDEN, 0:N].set(a2)
    cs = cs.at[C_BLK_R:C_BLK_R + HEADS * N, C_RHS:C_RHS + HC].set(blk)
    cs = cs.at[C_OW_R:C_OW_R + HIDDEN, C_RHS:C_RHS + OUT_CH].set(o_w)
    cs = cs.at[C_C1B_R, C_RHS:C_RHS + HC].set(c1_b[0])
    cs = cs.at[C_N1G_R, C_RHS:C_RHS + HC].set(n1_g[0])
    cs = cs.at[C_N1B_R, C_RHS:C_RHS + HC].set(n1_b[0])
    cs = cs.at[C_C2B_R, C_RHS:C_RHS + HIDDEN].set(c2_b[0])
    cs = cs.at[C_N2G_R, C_RHS:C_RHS + HIDDEN].set(n2_g[0])
    cs = cs.at[C_N2B_R, C_RHS:C_RHS + HIDDEN].set(n2_b[0])
    cs = cs.at[C_OB_R, C_RHS:C_RHS + OUT_CH].set(o_b[0])
    return w1, w2, cs


# ----------------------------- wrapper / glue ---------------------------------
@jax.jit
def gat_model_forward(x, adj, w1, w2, cslab):
    adj_w = jnp.tile(adj, (1, HEADS))                 # [N, HEADS*N], col h*N+j
    vmem = pltpu.MemorySpace.VMEM
    return pl.pallas_call(
        gat_model_kernel,
        out_shape=jax.ShapeDtypeStruct((x.shape[0], OUT_CH), jnp.float32),
        in_specs=[pl.BlockSpec(memory_space=vmem)] * 5,
        out_specs=pl.BlockSpec(memory_space=vmem),
    )(x, adj_w, w1, w2, cslab)


# ----------------------------- synthetic parameters ---------------------------
def init_params(key):
    """Deterministic synthetic parameters (shapes mirror GATModel.__init__)."""
    ks = jax.random.split(key, 24)
    hc = HC

    def w(k, shape, scale=0.2):
        return jax.random.normal(k, shape, jnp.float32) * scale

    return (
        w(ks[0], (IN_CH, hc)), w(ks[1], (1, hc), 0.05),             # conv1 lin_l
        w(ks[2], (IN_CH, hc)), w(ks[3], (1, hc), 0.05),             # conv1 lin_r
        w(ks[4], (HEADS, HIDDEN)),                                  # conv1 att
        w(ks[5], (1, hc), 0.05),                                    # conv1 bias
        1.0 + w(ks[6], (1, hc), 0.1), w(ks[7], (1, hc), 0.05),      # norm1
        w(ks[8], (IN_CH, hc)), w(ks[9], (1, hc), 0.05),             # residual1
        w(ks[10], (hc, HIDDEN)), w(ks[11], (1, HIDDEN), 0.05),      # conv2 lin_l
        w(ks[12], (hc, HIDDEN)), w(ks[13], (1, HIDDEN), 0.05),      # conv2 lin_r
        w(ks[14], (1, HIDDEN)),                                     # conv2 att
        w(ks[15], (1, HIDDEN), 0.05),                               # conv2 bias
        1.0 + w(ks[16], (1, HIDDEN), 0.1), w(ks[17], (1, HIDDEN), 0.05),  # norm2
        w(ks[18], (hc, HIDDEN)), w(ks[19], (1, HIDDEN), 0.05),      # residual2
        w(ks[20], (hc, HIDDEN)), w(ks[21], (1, HIDDEN), 0.05),      # skip_connection
        w(ks[22], (HIDDEN, OUT_CH)), w(ks[23], (1, OUT_CH), 0.05),  # out_layer
    )


def build_adjacency(edge_index, n):
    """Dense mask adj[dst, src] = 1, plus self loops (add_self_loops)."""
    src, dst = edge_index[0], edge_index[1]
    adj = jnp.zeros((n, n), jnp.float32)
    adj = adj.at[dst, src].set(1.0)
    idx = jnp.arange(n)
    adj = adj.at[idx, idx].set(1.0)
    return adj


# ----------------------------- pure-JAX reference -----------------------------
def _gatv2_ref(x, adj, w_l, b_l, w_r, b_r, att, bias, heads, ch, concat):
    xl = x @ w_l + b_l
    xr = x @ w_r + b_r
    outs = []
    for h in range(heads):
        xl_h = xl[:, h * ch:(h + 1) * ch]
        xr_h = xr[:, h * ch:(h + 1) * ch]
        t = _leaky_relu(xr_h[:, None, :] + xl_h[None, :, :])
        e = jnp.sum(t * att[h].reshape(1, 1, ch), axis=-1)
        e = jnp.where(adj > 0, e, -1e30)
        e = e - jnp.max(e, axis=-1, keepdims=True)
        p = jnp.exp(e)
        a = p / jnp.sum(p, axis=-1, keepdims=True)
        outs.append(a @ xl_h)
    out = jnp.concatenate(outs, axis=-1) if concat else sum(outs) / heads
    return out + bias


def reference_forward(x, adj, p):
    (c1_wl, c1_bl, c1_wr, c1_br, c1_att, c1_b,
     n1_g, n1_b, r1_w, r1_b,
     c2_wl, c2_bl, c2_wr, c2_br, c2_att, c2_b,
     n2_g, n2_b, r2_w, r2_b,
     sk_w, sk_b, o_w, o_b) = p
    h = _gatv2_ref(x, adj, c1_wl, c1_bl, c1_wr, c1_br, c1_att, c1_b, HEADS, HIDDEN, True)
    h = _elu(_layer_norm(h, n1_g, n1_b) + x @ r1_w + r1_b)
    s = h
    h2 = _gatv2_ref(h, adj, c2_wl, c2_bl, c2_wr, c2_br, c2_att, c2_b, 1, HIDDEN, False)
    h2 = _elu(_layer_norm(h2, n2_g, n2_b) + s @ r2_w + r2_b)
    h2 = h2 + (s @ sk_w + sk_b)
    return h2 @ o_w + o_b


# ----------------------------------- main --------------------------------------
if __name__ == "__main__":
    key = jax.random.PRNGKey(0)
    kx, kp = jax.random.split(key, 2)

    # node features
    x = jax.random.normal(kx, (N, IN_CH), jnp.float32)

    # deterministic small graph: bidirectional ring + chords; edge_index [2, 40]
    ring_src = jnp.arange(N)
    ring_dst = (jnp.arange(N) + 1) % N
    chord_a = jnp.array([0, 3, 7, 11], dtype=jnp.int32)
    chord_b = jnp.array([8, 12, 2, 5], dtype=jnp.int32)
    src = jnp.concatenate([ring_src, ring_dst, chord_a, chord_b])
    dst = jnp.concatenate([ring_dst, ring_src, chord_b, chord_a])
    edge_index = jnp.stack([src, dst]).astype(jnp.int32)

    adj = build_adjacency(edge_index, N)
    params = init_params(kp)
    w1, w2, cslab = pack_params(params)

    out = gat_model_forward(x, adj, w1, w2, cslab)
    out = jax.block_until_ready(out)

    ref = reference_forward(x, adj, params)
    err = float(jnp.max(jnp.abs(out - ref)))

    assert out.shape == (N, OUT_CH), out.shape
    assert bool(jnp.all(jnp.isfinite(out)))
    assert err < 1e-1, f"kernel/reference mismatch, max abs diff = {err}"
    print("KERNEL_OK")
</pallas_src>

<mosaic_0001>
module attributes {stable_mosaic.version = 11 : i64} {
  func.func @gat_model_kernel(%arg0: memref<16x8xf32, #tpu.memory_space<vmem>>, %arg1: memref<16x64xf32, #tpu.memory_space<vmem>>, %arg2: memref<16x768xf32, #tpu.memory_space<vmem>>, %arg3: memref<40x256xf32, #tpu.memory_space<vmem>>, %arg4: memref<640x64xf32, #tpu.memory_space<vmem>>, %arg5: memref<16x4xf32, #tpu.memory_space<vmem>>) attributes {dimension_semantics = [], scalar_prefetch = 0 : i64, scratch_operands = 0 : i64, tpu.core_type = #tpu.core_type<tc>} {
    %c0 = arith.constant 0 : index
    %c0_0 = arith.constant 0 : index
    %0 = vector.load %arg0[%c0, %c0_0] : memref<16x8xf32, #tpu.memory_space<vmem>>, vector<16x8xf32>
    %c0_1 = arith.constant 0 : index
    %c0_2 = arith.constant 0 : index
    %1 = vector.load %arg1[%c0_1, %c0_2] : memref<16x64xf32, #tpu.memory_space<vmem>>, vector<16x64xf32>
    %c0_3 = arith.constant 0 : index
    %c0_4 = arith.constant 0 : index
    %2 = vector.load %arg2[%c0_3, %c0_4] : memref<16x768xf32, #tpu.memory_space<vmem>>, vector<8x768xf32>
    %cst = arith.constant dense<0.000000e+00> : vector<16x768xf32>
    %3 = tpu.matmul %0, %2, %cst {dimension_numbers = #tpu.dot_dimension_numbers<[1], [0], [0], [1], [0, 0, 1, 1], [], []>} : vector<16x8xf32>, vector<8x768xf32>, vector<16x768xf32> -> vector<16x768xf32>
    %c8 = arith.constant 8 : index
    %c0_5 = arith.constant 0 : index
    %4 = vector.load %arg2[%c8, %c0_5] : memref<16x768xf32, #tpu.memory_space<vmem>>, vector<1x768xf32>
    %5 = vector.broadcast %4 : vector<1x768xf32> to vector<16x768xf32>
    %6 = arith.addf %3, %5 : vector<16x768xf32>
    %7 = vector.extract_strided_slice %6 {offsets = [0, 0], sizes = [16, 512], strides = [1, 1]} : vector<16x768xf32> to vector<16x512xf32>
    %8 = vector.extract_strided_slice %6 {offsets = [0, 512], sizes = [16, 32], strides = [1, 1]} : vector<16x768xf32> to vector<16x32xf32>
    %9 = vector.extract_strided_slice %6 {offsets = [0, 640], sizes = [16, 32], strides = [1, 1]} : vector<16x768xf32> to vector<16x32xf32>
    %10 = vector.extract_strided_slice %8 {offsets = [0, 0], sizes = [1, 32], strides = [1, 1]} : vector<16x32xf32> to vector<1x32xf32>
    %11 = vector.extract_strided_slice %8 {offsets = [1, 0], sizes = [1, 32], strides = [1, 1]} : vector<16x32xf32> to vector<1x32xf32>
    %12 = vector.extract_strided_slice %8 {offsets = [2, 0], sizes = [1, 32], strides = [1, 1]} : vector<16x32xf32> to vector<1x32xf32>
    %13 = vector.extract_strided_slice %8 {offsets = [3, 0], sizes = [1, 32], strides = [1, 1]} : vector<16x32xf32> to vector<1x32xf32>
    %14 = vector.extract_strided_slice %8 {offsets = [4, 0], sizes = [1, 32], strides = [1, 1]} : vector<16x32xf32> to vector<1x32xf32>
    %15 = vector.extract_strided_slice %8 {offsets = [5, 0], sizes = [1, 32], strides = [1, 1]} : vector<16x32xf32> to vector<1x32xf32>
    %16 = vector.extract_strided_slice %8 {offsets = [6, 0], sizes = [1, 32], strides = [1, 1]} : vector<16x32xf32> to vector<1x32xf32>
    %17 = vector.extract_strided_slice %8 {offsets = [7, 0], sizes = [1, 32], strides = [1, 1]} : vector<16x32xf32> to vector<1x32xf32>
    %18 = vector.extract_strided_slice %8 {offsets = [8, 0], sizes = [1, 32], strides = [1, 1]} : vector<16x32xf32> to vector<1x32xf32>
    %19 = vector.extract_strided_slice %8 {offsets = [9, 0], sizes = [1, 32], strides = [1, 1]} : vector<16x32xf32> to vector<1x32xf32>
    %20 = vector.extract_strided_slice %8 {offsets = [10, 0], sizes = [1, 32], strides = [1, 1]} : vector<16x32xf32> to vector<1x32xf32>
    %21 = vector.extract_strided_slice %8 {offsets = [11, 0], sizes = [1, 32], strides = [1, 1]} : vector<16x32xf32> to vector<1x32xf32>
    %22 = vector.extract_strided_slice %8 {offsets = [12, 0], sizes = [1, 32], strides = [1, 1]} : vector<16x32xf32> to vector<1x32xf32>
    %23 = vector.extract_strided_slice %8 {offsets = [13, 0], sizes = [1, 32], strides = [1, 1]} : vector<16x32xf32> to vector<1x32xf32>
    %24 = vector.extract_strided_slice %8 {offsets = [14, 0], sizes = [1, 32], strides = [1, 1]} : vector<16x32xf32> to vector<1x32xf32>
    %25 = vector.extract_strided_slice %8 {offsets = [15, 0], sizes = [1, 32], strides = [1, 1]} : vector<16x32xf32> to vector<1x32xf32>
    %26 = tpu.concatenate %10, %11, %12, %13, %14, %15, %16, %17, %18, %19, %20, %21, %22, %23, %24, %25 in 1 : vector<1x32xf32>, vector<1x32xf32>, vector<1x32xf32>, vector<1x32xf32>, vector<1x32xf32>, vector<1x32xf32>, vector<1x32xf32>, vector<1x32xf32>, vector<1x32xf32>, vector<1x32xf32>, vector<1x32xf32>, vector<1x32xf32>, vector<1x32xf32>, vector<1x32xf32>, vector<1x32xf32>, vector<1x32xf32> -> vector<1x512xf32>
    %27 = vector.broadcast %26 : vector<1x512xf32> to vector<16x512xf32>
    %28 = arith.addf %7, %27 : vector<16x512xf32>
    %cst_6 = arith.constant 0.000000e+00 : f32
    %29 = vector.broadcast %cst_6 : f32 to vector<16x512xf32>
    %30 = arith.cmpf ogt, %28, %29 : vector<16x512xf32>
    %cst_7 = arith.constant 2.000000e-01 : f32
    %31 = vector.broadcast %cst_7 : f32 to vector<16x512xf32>
    %32 = arith.mulf %31, %28 : vector<16x512xf32>
    %33 = arith.select %30, %28, %32 : vector<16x512xi1>, vector<16x512xf32>
    %c0_8 = arith.constant 0 : index
    %c0_9 = arith.constant 0 : index
    %34 = vector.load %arg4[%c0_8, %c0_9] : memref<640x64xf32, #tpu.memory_space<vmem>>, vector<512x64xf32>
    %cst_10 = arith.constant dense<0.000000e+00> : vector<16x64xf32>
    %35 = tpu.matmul %33, %34, %cst_10 {dimension_numbers = #tpu.dot_dimension_numbers<[1], [0], [0], [1], [0, 0, 1, 1], [], []>} : vector<16x512xf32>, vector<512x64xf32>, vector<16x64xf32> -> vector<16x64xf32>
    %cst_11 = arith.constant 0.000000e+00 : f32
    %36 = vector.broadcast %cst_11 : f32 to vector<16x64xf32>
    %37 = arith.cmpf ogt, %1, %36 : vector<16x64xf32>
    %cst_12 = arith.constant -1.000000e+30 : f32
    %38 = vector.broadcast %cst_12 : f32 to vector<16x64xf32>
    %39 = arith.select %37, %35, %38 : vector<16x64xi1>, vector<16x64xf32>
    %40 = vector.extract_strided_slice %39 {offsets = [0, 0], sizes = [16, 16], strides = [1, 1]} : vector<16x64xf32> to vector<16x16xf32>
    %cst_13 = arith.constant dense<0xFF800000> : vector<16xf32>
    %41 = vector.multi_reduction <maximumf>, %40, %cst_13 [1] : vector<16x16xf32> to vector<16xf32>
    %42 = vector.shape_cast %41 : vector<16xf32> to vector<16x1xf32>
    %43 = vector.broadcast %42 : vector<16x1xf32> to vector<16x16xf32>
    %44 = arith.subf %40, %43 : vector<16x16xf32>
    %45 = math.exp %44 : vector<16x16xf32>
    %cst_14 = arith.constant dense<0.000000e+00> : vector<16xf32>
    %46 = vector.multi_reduction <add>, %45, %cst_14 [1] : vector<16x16xf32> to vector<16xf32>
    %47 = vector.shape_cast %46 : vector<16xf32> to vector<16x1xf32>
    %48 = vector.broadcast %47 : vector<16x1xf32> to vector<16x16xf32>
    %49 = arith.divf %45, %48 : vector<16x16xf32>
    %50 = vector.extract_strided_slice %39 {offsets = [0, 16], sizes = [16, 16], strides = [1, 1]} : vector<16x64xf32> to vector<16x16xf32>
    %cst_15 = arith.constant dense<0xFF800000> : vector<16xf32>
    %51 = vector.multi_reduction <maximumf>, %50, %cst_15 [1] : vector<16x16xf32> to vector<16xf32>
    %52 = vector.shape_cast %51 : vector<16xf32> to vector<16x1xf32>
    %53 = vector.broadcast %52 : vector<16x1xf32> to vector<16x16xf32>
    %54 = arith.subf %50, %53 : vector<16x16xf32>
    %55 = math.exp %54 : vector<16x16xf32>
    %cst_16 = arith.constant dense<0.000000e+00> : vector<16xf32>
    %56 = vector.multi_reduction <add>, %55, %cst_16 [1] : vector<16x16xf32> to vector<16xf32>
    %57 = vector.shape_cast %56 : vector<16xf32> to vector<16x1xf32>
    %58 = vector.broadcast %57 : vector<16x1xf32> to vector<16x16xf32>
    %59 = arith.divf %55, %58 : vector<16x16xf32>
    %60 = vector.extract_strided_slice %39 {offsets = [0, 32], sizes = [16, 16], strides = [1, 1]} : vector<16x64xf32> to vector<16x16xf32>
    %cst_17 = arith.constant dense<0xFF800000> : vector<16xf32>
    %61 = vector.multi_reduction <maximumf>, %60, %cst_17 [1] : vector<16x16xf32> to vector<16xf32>
    %62 = vector.shape_cast %61 : vector<16xf32> to vector<16x1xf32>
    %63 = vector.broadcast %62 : vector<16x1xf32> to vector<16x16xf32>
    %64 = arith.subf %60, %63 : vector<16x16xf32>
    %65 = math.exp %64 : vector<16x16xf32>
    %cst_18 = arith.constant dense<0.000000e+00> : vector<16xf32>
    %66 = vector.multi_reduction <add>, %65, %cst_18 [1] : vector<16x16xf32> to vector<16xf32>
    %67 = vector.shape_cast %66 : vector<16xf32> to vector<16x1xf32>
    %68 = vector.broadcast %67 : vector<16x1xf32> to vector<16x16xf32>
    %69 = arith.divf %65, %68 : vector<16x16xf32>
    %70 = vector.extract_strided_slice %39 {offsets = [0, 48], sizes = [16, 16], strides = [1, 1]} : vector<16x64xf32> to vector<16x16xf32>
    %cst_19 = arith.constant dense<0xFF800000> : vector<16xf32>
    %71 = vector.multi_reduction <maximumf>, %70, %cst_19 [1] : vector<16x16xf32> to vector<16xf32>
    %72 = vector.shape_cast %71 : vector<16xf32> to vector<16x1xf32>
    %73 = vector.broadcast %72 : vector<16x1xf32> to vector<16x16xf32>
    %74 = arith.subf %70, %73 : vector<16x16xf32>
    %75 = math.exp %74 : vector<16x16xf32>
    %cst_20 = arith.constant dense<0.000000e+00> : vector<16xf32>
    %76 = vector.multi_reduction <add>, %75, %cst_20 [1] : vector<16x16xf32> to vector<16xf32>
    %77 = vector.shape_cast %76 : vector<16xf32> to vector<16x1xf32>
    %78 = vector.broadcast %77 : vector<16x1xf32> to vector<16x16xf32>
    %79 = arith.divf %75, %78 : vector<16x16xf32>
    %80 = tpu.concatenate %49, %59, %69, %79 in 1 : vector<16x16xf32>, vector<16x16xf32>, vector<16x16xf32>, vector<16x16xf32> -> vector<16x64xf32>
    %c512 = arith.constant 512 : index
    %c16 = arith.constant 16 : index
    %81 = vector.load %arg4[%c512, %c16] : memref<640x64xf32, #tpu.memory_space<vmem>>, vector<64x32xf32>
    %82 = tpu.concatenate %8, %8, %8, %8 in 0 : vector<16x32xf32>, vector<16x32xf32>, vector<16x32xf32>, vector<16x32xf32> -> vector<64x32xf32>
    %83 = arith.mulf %82, %81 : vector<64x32xf32>
    %cst_21 = arith.constant dense<0.000000e+00> : vector<16x32xf32>
    %84 = tpu.matmul %80, %83, %cst_21 {dimension_numbers = #tpu.dot_dimension_numbers<[1], [0], [0], [1], [0, 0, 1, 1], [], []>} : vector<16x64xf32>, vector<64x32xf32>, vector<16x32xf32> -> vector<16x32xf32>
    %c584 = arith.constant 584 : index
    %c16_22 = arith.constant 16 : index
    %85 = vector.load %arg4[%c584, %c16_22] : memref<640x64xf32, #tpu.memory_space<vmem>>, vector<1x32xf32>
    %86 = vector.broadcast %85 : vector<1x32xf32> to vector<16x32xf32>
    %87 = arith.addf %84, %86 : vector<16x32xf32>
    %c585 = arith.constant 585 : index
    %c16_23 = arith.constant 16 : index
    %88 = vector.load %arg4[%c585, %c16_23] : memref<640x64xf32, #tpu.memory_space<vmem>>, vector<1x32xf32>
    %c586 = arith.constant 586 : index
    %c16_24 = arith.constant 16 : index
    %89 = vector.load %arg4[%c586, %c16_24] : memref<640x64xf32, #tpu.memory_space<vmem>>, vector<1x32xf32>
    %cst_25 = arith.constant dense<0.000000e+00> : vector<16xf32>
    %90 = vector.multi_reduction <add>, %87, %cst_25 [1] : vector<16x32xf32> to vector<16xf32>
    %91 = vector.shape_cast %90 : vector<16xf32> to vector<16x1xf32>
    %cst_26 = arith.constant 3.200000e+01 : f32
    %92 = vector.broadcast %cst_26 : f32 to vector<16x1xf32>
    %93 = arith.divf %91, %92 : vector<16x1xf32>
    %94 = vector.broadcast %93 : vector<16x1xf32> to vector<16x32xf32>
    %95 = arith.subf %87, %94 : vector<16x32xf32>
    %96 = arith.mulf %95, %95 : vector<16x32xf32>
    %cst_27 = arith.constant dense<0.000000e+00> : vector<16xf32>
    %97 = vector.multi_reduction <add>, %96, %cst_27 [1] : vector<16x32xf32> to vector<16xf32>
    %98 = vector.shape_cast %97 : vector<16xf32> to vector<16x1xf32>
    %cst_28 = arith.constant 3.200000e+01 : f32
    %99 = vector.broadcast %cst_28 : f32 to vector<16x1xf32>
    %100 = arith.divf %98, %99 : vector<16x1xf32>
    %101 = vector.broadcast %93 : vector<16x1xf32> to vector<16x32xf32>
    %102 = arith.subf %87, %101 : vector<16x32xf32>
    %cst_29 = arith.constant 9.99999974E-6 : f32
    %103 = vector.broadcast %cst_29 : f32 to vector<16x1xf32>
    %104 = arith.addf %100, %103 : vector<16x1xf32>
    %105 = math.rsqrt %104 : vector<16x1xf32>
    %106 = vector.broadcast %105 : vector<16x1xf32> to vector<16x32xf32>
    %107 = arith.mulf %102, %106 : vector<16x32xf32>
    %108 = vector.broadcast %88 : vector<1x32xf32> to vector<16x32xf32>
    %109 = arith.mulf %107, %108 : vector<16x32xf32>
    %110 = vector.broadcast %89 : vector<1x32xf32> to vector<16x32xf32>
    %111 = arith.addf %109, %110 : vector<16x32xf32>
    %112 = arith.addf %111, %9 : vector<16x32xf32>
    %cst_30 = arith.constant 0.000000e+00 : f32
    %113 = vector.broadcast %cst_30 : f32 to vector<16x32xf32>
    %114 = arith.cmpf ogt, %112, %113 : vector<16x32xf32>
    %cst_31 = arith.constant 0.000000e+00 : f32
    %115 = vector.broadcast %cst_31 : f32 to vector<16x32xf32>
    %116 = arith.minimumf %112, %115 : vector<16x32xf32>
    %117 = math.exp %116 : vector<16x32xf32>
    %cst_32 = arith.constant 1.000000e+00 : f32
    %118 = vector.broadcast %cst_32 : f32 to vector<16x32xf32>
    %119 = arith.subf %117, %118 : vector<16x32xf32>
    %120 = arith.select %114, %112, %119 : vector<16x32xi1>, vector<16x32xf32>
    %c0_33 = arith.constant 0 : index
    %c0_34 = arith.constant 0 : index
    %121 = vector.load %arg3[%c0_33, %c0_34] : memref<40x256xf32, #tpu.memory_space<vmem>>, vector<32x256xf32>
    %cst_35 = arith.constant dense<0.000000e+00> : vector<16x256xf32>
    %122 = tpu.matmul %120, %121, %cst_35 {dimension_numbers = #tpu.dot_dimension_numbers<[1], [0], [0], [1], [0, 0, 1, 1], [], []>} : vector<16x32xf32>, vector<32x256xf32>, vector<16x256xf32> -> vector<16x256xf32>
    %c32 = arith.constant 32 : index
    %c0_36 = arith.constant 0 : index
    %123 = vector.load %arg3[%c32, %c0_36] : memref<40x256xf32, #tpu.memory_space<vmem>>, vector<1x256xf32>
    %124 = vector.broadcast %123 : vector<1x256xf32> to vector<16x256xf32>
    %125 = arith.addf %122, %124 : vector<16x256xf32>
    %126 = vector.extract_strided_slice %125 {offsets = [0, 0], sizes = [16, 128], strides = [1, 1]} : vector<16x256xf32> to vector<16x128xf32>
    %127 = vector.extract_strided_slice %125 {offsets = [0, 128], sizes = [16, 8], strides = [1, 1]} : vector<16x256xf32> to vector<16x8xf32>
    %128 = vector.extract_strided_slice %125 {offsets = [0, 136], sizes = [16, 8], strides = [1, 1]} : vector<16x256xf32> to vector<16x8xf32>
    %129 = vector.extract_strided_slice %125 {offsets = [0, 144], sizes = [16, 8], strides = [1, 1]} : vector<16x256xf32> to vector<16x8xf32>
    %130 = vector.extract_strided_slice %127 {offsets = [0, 0], sizes = [1, 8], strides = [1, 1]} : vector<16x8xf32> to vector<1x8xf32>
    %131 = vector.extract_strided_slice %127 {offsets = [1, 0], sizes = [1, 8], strides = [1, 1]} : vector<16x8xf32> to vector<1x8xf32>
    %132 = vector.extract_strided_slice %127 {offsets = [2, 0], sizes = [1, 8], strides = [1, 1]} : vector<16x8xf32> to vector<1x8xf32>
    %133 = vector.extract_strided_slice %127 {offsets = [3, 0], sizes = [1, 8], strides = [1, 1]} : vector<16x8xf32> to vector<1x8xf32>
    %134 = vector.extract_strided_slice %127 {offsets = [4, 0], sizes = [1, 8], strides = [1, 1]} : vector<16x8xf32> to vector<1x8xf32>
    %135 = vector.extract_strided_slice %127 {offsets = [5, 0], sizes = [1, 8], strides = [1, 1]} : vector<16x8xf32> to vector<1x8xf32>
    %136 = vector.extract_strided_slice %127 {offsets = [6, 0], sizes = [1, 8], strides = [1, 1]} : vector<16x8xf32> to vector<1x8xf32>
    %137 = vector.extract_strided_slice %127 {offsets = [7, 0], sizes = [1, 8], strides = [1, 1]} : vector<16x8xf32> to vector<1x8xf32>
    %138 = vector.extract_strided_slice %127 {offsets = [8, 0], sizes = [1, 8], strides = [1, 1]} : vector<16x8xf32> to vector<1x8xf32>
    %139 = vector.extract_strided_slice %127 {offsets = [9, 0], sizes = [1, 8], strides = [1, 1]} : vector<16x8xf32> to vector<1x8xf32>
    %140 = vector.extract_strided_slice %127 {offsets = [10, 0], sizes = [1, 8], strides = [1, 1]} : vector<16x8xf32> to vector<1x8xf32>
    %141 = vector.extract_strided_slice %127 {offsets = [11, 0], sizes = [1, 8], strides = [1, 1]} : vector<16x8xf32> to vector<1x8xf32>
    %142 = vector.extract_strided_slice %127 {offsets = [12, 0], sizes = [1, 8], strides = [1, 1]} : vector<16x8xf32> to vector<1x8xf32>
    %143 = vector.extract_strided_slice %127 {offsets = [13, 0], sizes = [1, 8], strides = [1, 1]} : vector<16x8xf32> to vector<1x8xf32>
    %144 = vector.extract_strided_slice %127 {offsets = [14, 0], sizes = [1, 8], strides = [1, 1]} : vector<16x8xf32> to vector<1x8xf32>
    %145 = vector.extract_strided_slice %127 {offsets = [15, 0], sizes = [1, 8], strides = [1, 1]} : vector<16x8xf32> to vector<1x8xf32>
    %146 = tpu.concatenate %130, %131, %132, %133, %134, %135, %136, %137, %138, %139, %140, %141, %142, %143, %144, %145 in 1 : vector<1x8xf32>, vector<1x8xf32>, vector<1x8xf32>, vector<1x8xf32>, vector<1x8xf32>, vector<1x8xf32>, vector<1x8xf32>, vector<1x8xf32>, vector<1x8xf32>, vector<1x8xf32>, vector<1x8xf32>, vector<1x8xf32>, vector<1x8xf32>, vector<1x8xf32>, vector<1x8xf32>, vector<1x8xf32> -> vector<1x128xf32>
    %147 = vector.broadcast %146 : vector<1x128xf32> to vector<16x128xf32>
    %148 = arith.addf %126, %147 : vector<16x128xf32>
    %cst_37 = arith.constant 0.000000e+00 : f32
    %149 = vector.broadcast %cst_37 : f32 to vector<16x128xf32>
    %150 = arith.cmpf ogt, %148, %149 : vector<16x128xf32>
    %cst_38 = arith.constant 2.000000e-01 : f32
    %151 = vector.broadcast %cst_38 : f32 to vector<16x128xf32>
    %152 = arith.mulf %151, %148 : vector<16x128xf32>
    %153 = arith.select %150, %148, %152 : vector<16x128xi1>, vector<16x128xf32>
    %c512_39 = arith.constant 512 : index
    %c0_40 = arith.constant 0 : index
    %154 = vector.load %arg4[%c512_39, %c0_40] : memref<640x64xf32, #tpu.memory_space<vmem>>, vector<128x16xf32>
    %cst_41 = arith.constant dense<0.000000e+00> : vector<16x16xf32>
    %155 = tpu.matmul %153, %154, %cst_41 {dimension_numbers = #tpu.dot_dimension_numbers<[1], [0], [0], [1], [0, 0, 1, 1], [], []>} : vector<16x128xf32>, vector<128x16xf32>, vector<16x16xf32> -> vector<16x16xf32>
    %156 = vector.extract_strided_slice %1 {offsets = [0, 0], sizes = [16, 16], strides = [1, 1]} : vector<16x64xf32> to vector<16x16xf32>
    %cst_42 = arith.constant 0.000000e+00 : f32
    %157 = vector.broadcast %cst_42 : f32 to vector<16x16xf32>
    %158 = arith.cmpf ogt, %156, %157 : vector<16x16xf32>
    %cst_43 = arith.constant -1.000000e+30 : f32
    %159 = vector.broadcast %cst_43 : f32 to vector<16x16xf32>
    %160 = arith.select %158, %155, %159 : vector<16x16xi1>, vector<16x16xf32>
    %cst_44 = arith.constant dense<0xFF800000> : vector<16xf32>
    %161 = vector.multi_reduction <maximumf>, %160, %cst_44 [1] : vector<16x16xf32> to vector<16xf32>
    %162 = vector.shape_cast %161 : vector<16xf32> to vector<16x1xf32>
    %163 = vector.broadcast %162 : vector<16x1xf32> to vector<16x16xf32>
    %164 = arith.subf %160, %163 : vector<16x16xf32>
    %165 = math.exp %164 : vector<16x16xf32>
    %cst_45 = arith.constant dense<0.000000e+00> : vector<16xf32>
    %166 = vector.multi_reduction <add>, %165, %cst_45 [1] : vector<16x16xf32> to vector<16xf32>
    %167 = vector.shape_cast %166 : vector<16xf32> to vector<16x1xf32>
    %168 = vector.broadcast %167 : vector<16x1xf32> to vector<16x16xf32>
    %169 = arith.divf %165, %168 : vector<16x16xf32>
    %cst_46 = arith.constant dense<0.000000e+00> : vector<16x8xf32>
    %170 = tpu.matmul %169, %127, %cst_46 {dimension_numbers = #tpu.dot_dimension_numbers<[1], [0], [0], [1], [0, 0, 1, 1], [], []>} : vector<16x16xf32>, vector<16x8xf32>, vector<16x8xf32> -> vector<16x8xf32>
    %c587 = arith.constant 587 : index
    %c16_47 = arith.constant 16 : index
    %171 = vector.load %arg4[%c587, %c16_47] : memref<640x64xf32, #tpu.memory_space<vmem>>, vector<1x8xf32>
    %172 = vector.broadcast %171 : vector<1x8xf32> to vector<16x8xf32>
    %173 = arith.addf %170, %172 : vector<16x8xf32>
    %c588 = arith.constant 588 : index
    %c16_48 = arith.constant 16 : index
    %174 = vector.load %arg4[%c588, %c16_48] : memref<640x64xf32, #tpu.memory_space<vmem>>, vector<1x8xf32>
    %c589 = arith.constant 589 : index
    %c16_49 = arith.constant 16 : index
    %175 = vector.load %arg4[%c589, %c16_49] : memref<640x64xf32, #tpu.memory_space<vmem>>, vector<1x8xf32>
    %cst_50 = arith.constant dense<0.000000e+00> : vector<16xf32>
    %176 = vector.multi_reduction <add>, %173, %cst_50 [1] : vector<16x8xf32> to vector<16xf32>
    %177 = vector.shape_cast %176 : vector<16xf32> to vector<16x1xf32>
    %cst_51 = arith.constant 8.000000e+00 : f32
    %178 = vector.broadcast %cst_51 : f32 to vector<16x1xf32>
    %179 = arith.divf %177, %178 : vector<16x1xf32>
    %180 = vector.broadcast %179 : vector<16x1xf32> to vector<16x8xf32>
    %181 = arith.subf %173, %180 : vector<16x8xf32>
    %182 = arith.mulf %181, %181 : vector<16x8xf32>
    %cst_52 = arith.constant dense<0.000000e+00> : vector<16xf32>
    %183 = vector.multi_reduction <add>, %182, %cst_52 [1] : vector<16x8xf32> to vector<16xf32>
    %184 = vector.shape_cast %183 : vector<16xf32> to vector<16x1xf32>
    %cst_53 = arith.constant 8.000000e+00 : f32
    %185 = vector.broadcast %cst_53 : f32 to vector<16x1xf32>
    %186 = arith.divf %184, %185 : vector<16x1xf32>
    %187 = vector.broadcast %179 : vector<16x1xf32> to vector<16x8xf32>
    %188 = arith.subf %173, %187 : vector<16x8xf32>
    %cst_54 = arith.constant 9.99999974E-6 : f32
    %189 = vector.broadcast %cst_54 : f32 to vector<16x1xf32>
    %190 = arith.addf %186, %189 : vector<16x1xf32>
    %191 = math.rsqrt %190 : vector<16x1xf32>
    %192 = vector.broadcast %191 : vector<16x1xf32> to vector<16x8xf32>
    %193 = arith.mulf %188, %192 : vector<16x8xf32>
    %194 = vector.broadcast %174 : vector<1x8xf32> to vector<16x8xf32>
    %195 = arith.mulf %193, %194 : vector<16x8xf32>
    %196 = vector.broadcast %175 : vector<1x8xf32> to vector<16x8xf32>
    %197 = arith.addf %195, %196 : vector<16x8xf32>
    %198 = arith.addf %197, %128 : vector<16x8xf32>
    %cst_55 = arith.constant 0.000000e+00 : f32
    %199 = vector.broadcast %cst_55 : f32 to vector<16x8xf32>
    %200 = arith.cmpf ogt, %198, %199 : vector<16x8xf32>
    %cst_56 = arith.constant 0.000000e+00 : f32
    %201 = vector.broadcast %cst_56 : f32 to vector<16x8xf32>
    %202 = arith.minimumf %198, %201 : vector<16x8xf32>
    %203 = math.exp %202 : vector<16x8xf32>
    %cst_57 = arith.constant 1.000000e+00 : f32
    %204 = vector.broadcast %cst_57 : f32 to vector<16x8xf32>
    %205 = arith.subf %203, %204 : vector<16x8xf32>
    %206 = arith.select %200, %198, %205 : vector<16x8xi1>, vector<16x8xf32>
    %207 = arith.addf %206, %129 : vector<16x8xf32>
    %c576 = arith.constant 576 : index
    %c16_58 = arith.constant 16 : index
    %208 = vector.load %arg4[%c576, %c16_58] : memref<640x64xf32, #tpu.memory_space<vmem>>, vector<8x4xf32>
    %cst_59 = arith.constant dense<0.000000e+00> : vector<16x4xf32>
    %209 = tpu.matmul %207, %208, %cst_59 {dimension_numbers = #tpu.dot_dimension_numbers<[1], [0], [0], [1], [0, 0, 1, 1], [], []>} : vector<16x8xf32>, vector<8x4xf32>, vector<16x4xf32> -> vector<16x4xf32>
    %c590 = arith.constant 590 : index
    %c16_60 = arith.constant 16 : index
    %210 = vector.load %arg4[%c590, %c16_60] : memref<640x64xf32, #tpu.memory_space<vmem>>, vector<1x4xf32>
    %211 = vector.broadcast %210 : vector<1x4xf32> to vector<16x4xf32>
    %212 = arith.addf %209, %211 : vector<16x4xf32>
    %c0_61 = arith.constant 0 : index
    %c0_62 = arith.constant 0 : index
    %213 = vector.load %arg5[%c0_61, %c0_62] : memref<16x4xf32, #tpu.memory_space<vmem>>, vector<16x4xf32>
    tpu.vector_store %arg5[%c0_61, %c0_62], %212 {strides = array<i32>} : memref<16x4xf32, #tpu.memory_space<vmem>>, vector<16x4xf32>,
    return
  }
}

</mosaic_0001>

<llo_original>
// kernel: tile.9
$region0: #{tile.9}
  %s0 = inlined_call_operand.vmem [shape: f32[16,4,16], index: 0, kind: input, shape index: {}]
  %s1 = inlined_call_operand.vmem [shape: f32[16,64], index: 1, kind: output, shape index: {}]
  $region1: #{tile.9} parent=0
    #allocation0 [shape = 'u8[65536]{0}', space=vmem, size = 0x10000, scoped, tag = 'scoped mem for input reshape']
    %s3 = ssub.s32 16, 1
    %s4 = scalar_lea.vmem %s0, 60
    %v5 = vld [vmem:[%s4] sm:%s3]
    %s6 = scalar_lea.vmem [#allocation0], 120
    %7 = vst [vmem:[%s6] sm:%s3] %v5
    %s8 = scalar_lea.vmem %s0, 56
    %v9 = vld [vmem:[%s8] sm:%s3]
    %s10 = scalar_lea.vmem [#allocation0], 112
    %11 = vst [vmem:[%s10] sm:%s3] %v9
    %s12 = scalar_lea.vmem %s0, 52
    %v13 = vld [vmem:[%s12] sm:%s3]
    %s14 = scalar_lea.vmem [#allocation0], 104
    %15 = vst [vmem:[%s14] sm:%s3] %v13
    %s16 = scalar_lea.vmem %s0, 48
    %v17 = vld [vmem:[%s16] sm:%s3]
    %s18 = scalar_lea.vmem [#allocation0], 96
    %19 = vst [vmem:[%s18] sm:%s3] %v17
    %s20 = scalar_lea.vmem %s0, 44
    %v21 = vld [vmem:[%s20] sm:%s3]
    %s22 = scalar_lea.vmem [#allocation0], 88
    %23 = vst [vmem:[%s22] sm:%s3] %v21
    %s24 = scalar_lea.vmem %s0, 40
    %v25 = vld [vmem:[%s24] sm:%s3]
    %s26 = scalar_lea.vmem [#allocation0], 80
    %27 = vst [vmem:[%s26] sm:%s3] %v25
    %s28 = scalar_lea.vmem %s0, 36
    %v29 = vld [vmem:[%s28] sm:%s3]
    %s30 = scalar_lea.vmem [#allocation0], 72
    %31 = vst [vmem:[%s30] sm:%s3] %v29
    %s32 = scalar_lea.vmem %s0, 32
    %v33 = vld [vmem:[%s32] sm:%s3]
    %s34 = scalar_lea.vmem [#allocation0], 64
    %35 = vst [vmem:[%s34] sm:%s3] %v33
    %s36 = scalar_lea.vmem %s0, 28
    %v37 = vld [vmem:[%s36] sm:%s3]
    %s38 = scalar_lea.vmem [#allocation0], 56
    %39 = vst [vmem:[%s38] sm:%s3] %v37
    %s40 = scalar_lea.vmem %s0, 24
    %v41 = vld [vmem:[%s40] sm:%s3]
    %s42 = scalar_lea.vmem [#allocation0], 48
    %43 = vst [vmem:[%s42] sm:%s3] %v41
    %s44 = scalar_lea.vmem %s0, 20
    %v45 = vld [vmem:[%s44] sm:%s3]
    %s46 = scalar_lea.vmem [#allocation0], 40
    %47 = vst [vmem:[%s46] sm:%s3] %v45
    %s48 = scalar_lea.vmem %s0, 16
    %v49 = vld [vmem:[%s48] sm:%s3]
    %s50 = scalar_lea.vmem [#allocation0], 32
    %51 = vst [vmem:[%s50] sm:%s3] %v49
    %s52 = scalar_lea.vmem %s0, 12
    %v53 = vld [vmem:[%s52] sm:%s3]
    %s54 = scalar_lea.vmem [#allocation0], 24
    %55 = vst [vmem:[%s54] sm:%s3] %v53
    %s56 = scalar_lea.vmem %s0, 8
    %v57 = vld [vmem:[%s56] sm:%s3]
    %s58 = scalar_lea.vmem [#allocation0], 16
    %59 = vst [vmem:[%s58] sm:%s3] %v57
    %s60 = scalar_lea.vmem %s0, 4
    %v61 = vld [vmem:[%s60] sm:%s3]
    %s62 = scalar_lea.vmem [#allocation0], 8
    %63 = vst [vmem:[%s62] sm:%s3] %v61
    %v64 = vld [vmem:[%s0] sm:%s3]
    %65 = vst [vmem:[#allocation0] sm:%s3] %v64
    %v66 = vld [vmem:[#allocation0] ss:$8 sm:$0xf]
    %v67 = vld [vmem:[#allocation0] ss:$8 sm:$0xf0]
    %vm68 = vcmask 1047556
    %v69 = vsel %vm68, %v67, %v66
    %vm70 = vcmask 130048
    %71 = vst.msk [vmem:[%s1] sm:$0xff] %vm70, %v69
    %s72 = scalar_lea.vmem [#allocation0], 64
    %v73 = vld [vmem:[%s72] ss:$8 sm:$0xf]
    %s74 = scalar_lea.vmem [#allocation0], 64
    %v75 = vld [vmem:[%s74] ss:$8 sm:$0xf0]
    %vm76 = vcmask 1047556
    %v77 = vsel %vm76, %v75, %v73
    %vm78 = vcmask 130048
    %s79 = scalar_lea.vmem %s1, 8
    %80 = vst.msk [vmem:[%s79] sm:$0xff] %vm78, %v77
    %s81 = scalar_lea.vmem [#allocation0], 3
    %v82 = vld [vmem:[%s81] ss:$8 sm:$0xf]
    %s83 = scalar_lea.vmem [#allocation0], 3
    %v84 = vld [vmem:[%s83] ss:$8 sm:$0xf0]
    %vm85 = vcmask 1047556
    %v86 = vsel %vm85, %v84, %v82
    %87 = vrot.lane.b32.xlu0 %v86, 48
    %v88 = vpop.permute.xlu0 %87
    %vm89 = vcmask 523648
    %90 = vst.msk [vmem:[%s1] sm:$0xff] %vm89, %v88
    %s91 = scalar_lea.vmem [#allocation0], 67
    %v92 = vld [vmem:[%s91] ss:$8 sm:$0xf]
    %s93 = scalar_lea.vmem [#allocation0], 67
    %v94 = vld [vmem:[%s93] ss:$8 sm:$0xf0]
    %vm95 = vcmask 1047556
    %v96 = vsel %vm95, %v94, %v92
    %97 = vrot.lane.b32.xlu0 %v96, 48
    %v98 = vpop.permute.xlu0 %97
    %vm99 = vcmask 523648
    %s100 = scalar_lea.vmem %s1, 8
    %101 = vst.msk [vmem:[%s100] sm:$0xff] %vm99, %v98
    %s102 = scalar_lea.vmem [#allocation0], 2
    %v103 = vld [vmem:[%s102] ss:$8 sm:$0xf]
    %s104 = scalar_lea.vmem [#allocation0], 2
    %v105 = vld [vmem:[%s104] ss:$8 sm:$0xf0]
    %vm106 = vcmask 1047556
    %v107 = vsel %vm106, %v105, %v103
    %108 = vrot.lane.b32.xlu0 %v107, 32
    %v109 = vpop.permute.xlu0 %108
    %vm110 = vcmask 392448
    %111 = vst.msk [vmem:[%s1] sm:$0xff] %vm110, %v109
    %s112 = scalar_lea.vmem [#allocation0], 66
    %v113 = vld [vmem:[%s112] ss:$8 sm:$0xf]
    %s114 = scalar_lea.vmem [#allocation0], 66
    %v115 = vld [vmem:[%s114] ss:$8 sm:$0xf0]
    %vm116 = vcmask 1047556
    %v117 = vsel %vm116, %v115, %v113
    %118 = vrot.lane.b32.xlu0 %v117, 32
    %v119 = vpop.permute.xlu0 %118
    %vm120 = vcmask 392448
    %s121 = scalar_lea.vmem %s1, 8
    %122 = vst.msk [vmem:[%s121] sm:$0xff] %vm120, %v119
    %s123 = scalar_lea.vmem [#allocation0], 1
    %v124 = vld [vmem:[%s123] ss:$8 sm:$0xf]
    %s125 = scalar_lea.vmem [#allocation0], 1
    %v126 = vld [vmem:[%s125] ss:$8 sm:$0xf0]
    %vm127 = vcmask 1047556
    %v128 = vsel %vm127, %v126, %v124
    %129 = vrot.lane.b32.xlu0 %v128, 16
    %v130 = vpop.permute.xlu0 %129
    %vm131 = vcmask 261248
    %132 = vst.msk [vmem:[%s1] sm:$0xff] %vm131, %v130
    %s133 = scalar_lea.vmem [#allocation0], 65
    %v134 = vld [vmem:[%s133] ss:$8 sm:$0xf]
    %s135 = scalar_lea.vmem [#allocation0], 65
    %v136 = vld [vmem:[%s135] ss:$8 sm:$0xf0]
    %vm137 = vcmask 1047556
    %v138 = vsel %vm137, %v136, %v134
    %139 = vrot.lane.b32.xlu0 %v138, 16
    %v140 = vpop.permute.xlu0 %139
    %vm141 = vcmask 261248
    %s142 = scalar_lea.vmem %s1, 8
    %143 = vst.msk [vmem:[%s142] sm:$0xff] %vm141, %v140

// kernel: gat_model_forward.1
$region0: #{gat_model_forward.1}
  #allocation0 [shape = 'u32[]', space=smem, size = 0x4, offset = 0x4, fixed_abs, tag = 'smem constant byte address 0x4 - core index']
  #allocation1 [shape = 'u32[72,128]{1,0:T(1,128)}', space=vmem, size = 0x9000, scoped, tag = 'internal scratch']
  %s0 = inlined_call_operand.vmem [shape: f32[16,8], index: 0, kind: input, shape index: {}]
  %s1 = inlined_call_operand.vmem [shape: f32[16,64], index: 1, kind: input, shape index: {}]
  %s2 = inlined_call_operand.vmem [shape: f32[16,768], index: 2, kind: input, shape index: {}]
  %s3 = inlined_call_operand.vmem [shape: f32[40,256], index: 3, kind: input, shape index: {}]
  %s4 = inlined_call_operand.vmem [shape: f32[640,64], index: 4, kind: input, shape index: {}]
  %s5 = inlined_call_operand.vmem [shape: f32[16,4], index: 5, kind: output, shape index: {}]
  %s6 = sld [smem:[#allocation0]]
  $region30: #{gat_model_forward.1} parent=0
    _
  %s8 = ssub.s32 1, %s6
  %s9 = scalar_select 0, %s8, %s6
  // Predicated region
  $region2: #{gat_model_forward.1} parent=0 // pred_check
    _
  $region3: #{gat_model_forward.1} parent=0 // pred_check_branch
    %11 = sbr.rel (0) target = $region5
  $region4: #{gat_model_forward.1} parent=0 // pred_region
    _
  $region5: #{gat_model_forward.1} parent=0 // pred_fallthru
    _
  // Predicated region
  $region6: #{gat_model_forward.1} parent=0 // pred_check
    _
  $region7: #{gat_model_forward.1} parent=0 // pred_check_branch
    %13 = sbr.rel (0) target = $region9
  $region8: #{gat_model_forward.1} parent=0 // pred_region
    _
  $region9: #{gat_model_forward.1} parent=0 // pred_fallthru
    _
  // Predicated region
  $region10: #{gat_model_forward.1} parent=0 // pred_check
    _
  $region11: #{gat_model_forward.1} parent=0 // pred_check_branch
    %15 = sbr.rel (0) target = $region13
  $region12: #{gat_model_forward.1} parent=0 // pred_region
    _
  $region13: #{gat_model_forward.1} parent=0 // pred_fallthru
    _
  // Predicated region
  $region14: #{gat_model_forward.1} parent=0 // pred_check
    _
  $region15: #{gat_model_forward.1} parent=0 // pred_check_branch
    %17 = sbr.rel (0) target = $region17
  $region16: #{gat_model_forward.1} parent=0 // pred_region
    _
  $region17: #{gat_model_forward.1} parent=0 // pred_fallthru
    _
  // Predicated region
  $region18: #{gat_model_forward.1} parent=0 // pred_check
    _
  $region19: #{gat_model_forward.1} parent=0 // pred_check_branch
    %19 = sbr.rel (0) target = $region21
  $region20: #{gat_model_forward.1} parent=0 // pred_region
    _
  $region21: #{gat_model_forward.1} parent=0 // pred_fallthru
    _
  %v20 = vld [vmem:[%s0] sm:$0xff]
  %v21 = vld [vmem:[%s0 + $0x8] sm:$0xff]
  %v22 = vld [vmem:[%s1] sm:$0xff]
  %v23 = vld [vmem:[%s1 + $0x8] sm:$0xff]
  %v24 = vld [vmem:[%s2] sm:$0xff]
  %v25 = vld [vmem:[%s2 + $0x8] sm:$0xff]
  %v26 = vld [vmem:[%s2 + $0x10] sm:$0xff]
  %v27 = vld [vmem:[%s2 + $0x18] sm:$0xff]
  %v28 = vld [vmem:[%s2 + $0x20] sm:$0xff]
  %v29 = vld [vmem:[%s2 + $0x28] sm:$0xff]
  %s30 = scalar_lea.vmem %s2, 48
  %v31 = vld [vmem:[%s30] ss:$8 sm:$0xf]
  %v32 = vld [vmem:[%s30] ss:$8 sm:$0x30]
  %v33 = vor.u32 %v31, %v32
  %v35 = vperm.slane %v33, 0
  %v36 = vperm.slane %v33, 1
  %v37 = vperm.slane %v33, 2
  %v38 = vperm.slane %v33, 3
  %v39 = vperm.slane %v33, 4
  %v40 = vperm.slane %v33, 5
  %vm47 = vcmask 64512
  %v49 = vsel %vm47, %v20, 0
  %v52 = vsel %vm47, %v21, 0
  %54 = vmatpush.msra.mxu0 0.0
  %55 = vmatpush.msra.mxu0 0.0
  %56 = vmatpush.msra.mxu0 0.0
  %57 = vmatpush.msra.mxu0 0.0
  %58 = vmatpush.msra.mxu0 0.0
  %59 = vmatpush.msra.mxu0 0.0
  %60 = vmatpush.msra.mxu0 0.0
  %61 = vmatpush.msra.mxu0 0.0
  %62 = vmatpush.msra.mxu0 0.0
  %63 = vmatpush.msra.mxu0 0.0
  %64 = vmatpush.msra.mxu0 0.0
  %65 = vmatpush.msra.mxu0 0.0
  %66 = vmatpush.msra.mxu0 0.0
  %67 = vmatpush.msra.mxu0 0.0
  %68 = vmatpush.msra.mxu0 0.0
  %69 = vmatpush.msra.mxu0 %v24
  %70 = vmatmul.f32.gmra.mxu0 %v49
  %v71 = vpop.f32.mrf.mxu0
  %v72 = vadd.f32 %v35, %v71
  %73 = vmatmul.f32.gmra.mxu0 %v52
  %v74 = vpop.f32.mrf.mxu0
  %v75 = vadd.f32 %v35, %v74
  %76 = vdwg.mxu0
  %77 = vmatpush.msra.mxu0 0.0
  %78 = vmatpush.msra.mxu0 0.0
  %79 = vmatpush.msra.mxu0 0.0
  %80 = vmatpush.msra.mxu0 0.0
  %81 = vmatpush.msra.mxu0 0.0
  %82 = vmatpush.msra.mxu0 0.0
  %83 = vmatpush.msra.mxu0 0.0
  %84 = vmatpush.msra.mxu0 0.0
  %85 = vmatpush.msra.mxu0 0.0
  %86 = vmatpush.msra.mxu0 0.0
  %87 = vmatpush.msra.mxu0 0.0
  %88 = vmatpush.msra.mxu0 0.0
  %89 = vmatpush.msra.mxu0 0.0
  %90 = vmatpush.msra.mxu0 0.0
  %91 = vmatpush.msra.mxu0 0.0
  %92 = vmatpush.msra.mxu0 %v25
  %93 = vmatmul.f32.gmra.mxu0 %v49
  %v94 = vpop.f32.mrf.mxu0
  %v95 = vadd.f32 %v36, %v94
  %96 = vmatmul.f32.gmra.mxu0 %v52
  %v97 = vpop.f32.mrf.mxu0
  %v98 = vadd.f32 %v36, %v97
  %99 = vdwg.mxu0
  %100 = vmatpush.msra.mxu0 0.0
  %101 = vmatpush.msra.mxu0 0.0
  %102 = vmatpush.msra.mxu0 0.0
  %103 = vmatpush.msra.mxu0 0.0
  %104 = vmatpush.msra.mxu0 0.0
  %105 = vmatpush.msra.mxu0 0.0
  %106 = vmatpush.msra.mxu0 0.0
  %107 = vmatpush.msra.mxu0 0.0
  %108 = vmatpush.msra.mxu0 0.0
  %109 = vmatpush.msra.mxu0 0.0
  %110 = vmatpush.msra.mxu0 0.0
  %111 = vmatpush.msra.mxu0 0.0
  %112 = vmatpush.msra.mxu0 0.0
  %113 = vmatpush.msra.mxu0 0.0
  %114 = vmatpush.msra.mxu0 0.0
  %115 = vmatpush.msra.mxu0 %v26
  %116 = vmatmul.f32.gmra.mxu0 %v49
  %v117 = vpop.f32.mrf.mxu0
  %v118 = vadd.f32 %v37, %v117
  %119 = vmatmul.f32.gmra.mxu0 %v52
  %v120 = vpop.f32.mrf.mxu0
  %v121 = vadd.f32 %v37, %v120
  %122 = vdwg.mxu0
  %123 = vmatpush.msra.mxu0 0.0
  %124 = vmatpush.msra.mxu0 0.0
  %125 = vmatpush.msra.mxu0 0.0
  %126 = vmatpush.msra.mxu0 0.0
  %127 = vmatpush.msra.mxu0 0.0
  %128 = vmatpush.msra.mxu0 0.0
  %129 = vmatpush.msra.mxu0 0.0
  %130 = vmatpush.msra.mxu0 0.0
  %131 = vmatpush.msra.mxu0 0.0
  %132 = vmatpush.msra.mxu0 0.0
  %133 = vmatpush.msra.mxu0 0.0
  %134 = vmatpush.msra.mxu0 0.0
  %135 = vmatpush.msra.mxu0 0.0
  %136 = vmatpush.msra.mxu0 0.0
  %137 = vmatpush.msra.mxu0 0.0
  %138 = vmatpush.msra.mxu0 %v27
  %139 = vmatmul.f32.gmra.mxu0 %v49
  %v140 = vpop.f32.mrf.mxu0
  %v141 = vadd.f32 %v38, %v140
  %142 = vmatmul.f32.gmra.mxu0 %v52
  %v143 = vpop.f32.mrf.mxu0
  %v144 = vadd.f32 %v38, %v143
  %145 = vdwg.mxu0
  %146 = vmatpush.msra.mxu0 0.0
  %147 = vmatpush.msra.mxu0 0.0
  %148 = vmatpush.msra.mxu0 0.0
  %149 = vmatpush.msra.mxu0 0.0
  %150 = vmatpush.msra.mxu0 0.0
  %151 = vmatpush.msra.mxu0 0.0
  %152 = vmatpush.msra.mxu0 0.0
  %153 = vmatpush.msra.mxu0 0.0
  %154 = vmatpush.msra.mxu0 0.0
  %155 = vmatpush.msra.mxu0 0.0
  %156 = vmatpush.msra.mxu0 0.0
  %157 = vmatpush.msra.mxu0 0.0
  %158 = vmatpush.msra.mxu0 0.0
  %159 = vmatpush.msra.mxu0 0.0
  %160 = vmatpush.msra.mxu0 0.0
  %161 = vmatpush.msra.mxu0 %v28
  %162 = vmatmul.f32.gmra.mxu0 %v49
  %v163 = vpop.f32.mrf.mxu0
  %v164 = vadd.f32 %v39, %v163
  %165 = vmatmul.f32.gmra.mxu0 %v52
  %v166 = vpop.f32.mrf.mxu0
  %v167 = vadd.f32 %v39, %v166
  %168 = vdwg.mxu0
  %169 = vmatpush.msra.mxu0 0.0
  %170 = vmatpush.msra.mxu0 0.0
  %171 = vmatpush.msra.mxu0 0.0
  %172 = vmatpush.msra.mxu0 0.0
  %173 = vmatpush.msra.mxu0 0.0
  %174 = vmatpush.msra.mxu0 0.0
  %175 = vmatpush.msra.mxu0 0.0
  %176 = vmatpush.msra.mxu0 0.0
  %177 = vmatpush.msra.mxu0 0.0
  %178 = vmatpush.msra.mxu0 0.0
  %179 = vmatpush.msra.mxu0 0.0
  %180 = vmatpush.msra.mxu0 0.0
  %181 = vmatpush.msra.mxu0 0.0
  %182 = vmatpush.msra.mxu0 0.0
  %183 = vmatpush.msra.mxu0 0.0
  %184 = vmatpush.msra.mxu0 %v29
  %185 = vmatmul.f32.gmra.mxu0 %v49
  %v186 = vpop.f32.mrf.mxu0
  %v187 = vadd.f32 %v40, %v186
  %188 = vmatmul.f32.gmra.mxu0 %v52
  %v189 = vpop.f32.mrf.mxu0
  %v190 = vadd.f32 %v40, %v189
  %191 = vdwg.mxu0
  %v193 = vrot.slane %v164, 1
  %194 = vrot.lane.b32.xlu0 %v193, 32
  %v195 = vpop.permute.xlu0 %194
  %v197 = vrot.slane %v164, 2
  %198 = vrot.lane.b32.xlu0 %v197, 64
  %v199 = vpop.permute.xlu0 %198
  %v201 = vrot.slane %v164, 3
  %202 = vrot.lane.b32.xlu0 %v201, 96
  %v203 = vpop.permute.xlu0 %202
  %v205 = vrot.slane %v164, 4
  %v207 = vrot.slane %v164, 5
  %208 = vrot.lane.b32.xlu0 %v207, 32
  %v209 = vpop.permute.xlu0 %208
  %v211 = vrot.slane %v164, 6
  %212 = vrot.lane.b32.xlu0 %v211, 64
  %v213 = vpop.permute.xlu0 %212
  %v215 = vrot.slane %v164, 7
  %216 = vrot.lane.b32.xlu0 %v215, 96
  %v217 = vpop.permute.xlu0 %216
  %v220 = vrot.slane %v167, 1
  %221 = vrot.lane.b32.xlu0 %v220, 32
  %v222 = vpop.permute.xlu0 %221
  %v224 = vrot.slane %v167, 2
  %225 = vrot.lane.b32.xlu0 %v224, 64
  %v226 = vpop.permute.xlu0 %225
  %v228 = vrot.slane %v167, 3
  %229 = vrot.lane.b32.xlu0 %v228, 96
  %v230 = vpop.permute.xlu0 %229
  %v232 = vrot.slane %v167, 4
  %v234 = vrot.slane %v167, 5
  %235 = vrot.lane.b32.xlu0 %v234, 32
  %v236 = vpop.permute.xlu0 %235
  %v238 = vrot.slane %v167, 6
  %239 = vrot.lane.b32.xlu0 %v238, 64
  %v240 = vpop.permute.xlu0 %239
  %v242 = vrot.slane %v167, 7
  %243 = vrot.lane.b32.xlu0 %v242, 96
  %v244 = vpop.permute.xlu0 %243
  %vm246 = vcmask 261120
  %v247 = vsel %vm246, %v164, %v195
  %vm248 = vcmask 523264
  %v249 = vsel %vm248, %v247, %v199
  %vm250 = vcmask 785408
  %v251 = vsel %vm250, %v249, %v203
  %v252 = vsel %vm246, %v205, %v209
  %v253 = vsel %vm248, %v252, %v213
  %v254 = vsel %vm250, %v253, %v217
  %v255 = vsel %vm246, %v167, %v222
  %v256 = vsel %vm248, %v255, %v226
  %v257 = vsel %vm250, %v256, %v230
  %v258 = vsel %vm246, %v232, %v236
  %v259 = vsel %vm248, %v258, %v240
  %v260 = vsel %vm250, %v259, %v244
  %v261 = vperm.slane %v251, 0
  %v262 = vperm.slane %v254, 0
  %v263 = vperm.slane %v257, 0
  %v264 = vperm.slane %v260, 0
  %v265 = vadd.f32 %v72, %v261
  %v266 = vadd.f32 %v95, %v262
  %v267 = vadd.f32 %v118, %v263
  %v268 = vadd.f32 %v141, %v264
  %v269 = vadd.f32 %v75, %v261
  %v270 = vadd.f32 %v98, %v262
  %v271 = vadd.f32 %v121, %v263
  %v272 = vadd.f32 %v144, %v264
  %vm273 = vcmp.gt.f32.partialorder %v265, 0.0
  %vm274 = vcmp.gt.f32.partialorder %v266, 0.0
  %vm275 = vcmp.gt.f32.partialorder %v267, 0.0
  %vm276 = vcmp.gt.f32.partialorder %v268, 0.0
  %vm277 = vcmp.gt.f32.partialorder %v269, 0.0
  %vm278 = vcmp.gt.f32.partialorder %v270, 0.0
  %vm279 = vcmp.gt.f32.partialorder %v271, 0.0
  %vm280 = vcmp.gt.f32.partialorder %v272, 0.0
  %v281 = vmul.f32 %v265, 0.2
  %v282 = vmul.f32 %v266, 0.2
  %v283 = vmul.f32 %v267, 0.2
  %v284 = vmul.f32 %v268, 0.2
  %v285 = vmul.f32 %v269, 0.2
  %v286 = vmul.f32 %v270, 0.2
  %v287 = vmul.f32 %v271, 0.2
  %v288 = vmul.f32 %v272, 0.2
  %v289 = vsel %vm273, %v265, %v281
  %v290 = vsel %vm274, %v266, %v282
  %v291 = vsel %vm275, %v267, %v283
  %v292 = vsel %vm276, %v268, %v284
  %v293 = vsel %vm277, %v269, %v285
  %v294 = vsel %vm278, %v270, %v286
  %v295 = vsel %vm279, %v271, %v287
  %v296 = vsel %vm280, %v272, %v288
  %v297 = vld [vmem:[%s4] sm:$0xff]
  %v298 = vld [vmem:[%s4 + $0x8] sm:$0xff]
  %v299 = vld [vmem:[%s4 + $0x10] sm:$0xff]
  %v300 = vld [vmem:[%s4 + $0x18] sm:$0xff]
  %v301 = vld [vmem:[%s4 + $0x20] sm:$0xff]
  %v302 = vld [vmem:[%s4 + $0x28] sm:$0xff]
  %v303 = vld [vmem:[%s4 + $0x30] sm:$0xff]
  %v304 = vld [vmem:[%s4 + $0x38] sm:$0xff]
  %v305 = vld [vmem:[%s4 + $0x40] sm:$0xff]
  %v306 = vld [vmem:[%s4 + $0x48] sm:$0xff]
  %v307 = vld [vmem:[%s4 + $0x50] sm:$0xff]
  %v308 = vld [vmem:[%s4 + $0x58] sm:$0xff]
  %v309 = vld [vmem:[%s4 + $0x60] sm:$0xff]
  %v310 = vld [vmem:[%s4 + $0x68] sm:$0xff]
  %v311 = vld [vmem:[%s4 + $0x70] sm:$0xff]
  %v312 = vld [vmem:[%s4 + $0x78] sm:$0xff]
  %v313 = vld [vmem:[%s4 + $0x80] sm:$0xff]
  %v314 = vld [vmem:[%s4 + $0x88] sm:$0xff]
  %v315 = vld [vmem:[%s4 + $0x90] sm:$0xff]
  %v316 = vld [vmem:[%s4 + $0x98] sm:$0xff]
  %v317 = vld [vmem:[%s4 + $0xa0] sm:$0xff]
  %v318 = vld [vmem:[%s4 + $0xa8] sm:$0xff]
  %v319 = vld [vmem:[%s4 + $0xb0] sm:$0xff]
  %v320 = vld [vmem:[%s4 + $0xb8] sm:$0xff]
  %v321 = vld [vmem:[%s4 + $0xc0] sm:$0xff]
  %v322 = vld [vmem:[%s4 + $0xc8] sm:$0xff]
  %v323 = vld [vmem:[%s4 + $0xd0] sm:$0xff]
  %v324 = vld [vmem:[%s4 + $0xd8] sm:$0xff]
  %v325 = vld [vmem:[%s4 + $0xe0] sm:$0xff]
  %v326 = vld [vmem:[%s4 + $0xe8] sm:$0xff]
  %v327 = vld [vmem:[%s4 + $0xf0] sm:$0xff]
  %v328 = vld [vmem:[%s4 + $0xf8] sm:$0xff]
  %v329 = vld [vmem:[%s4 + $0x100] sm:$0xff]
  %v330 = vld [vmem:[%s4 + $0x108] sm:$0xff]
  %v331 = vld [vmem:[%s4 + $0x110] sm:$0xff]
  %v332 = vld [vmem:[%s4 + $0x118] sm:$0xff]
  %v333 = vld [vmem:[%s4 + $0x120] sm:$0xff]
  %v334 = vld [vmem:[%s4 + $0x128] sm:$0xff]
  %v335 = vld [vmem:[%s4 + $0x130] sm:$0xff]
  %v336 = vld [vmem:[%s4 + $0x138] sm:$0xff]
  %v337 = vld [vmem:[%s4 + $0x140] sm:$0xff]
  %v338 = vld [vmem:[%s4 + $0x148] sm:$0xff]
  %v339 = vld [vmem:[%s4 + $0x150] sm:$0xff]
  %v340 = vld [vmem:[%s4 + $0x158] sm:$0xff]
  %v341 = vld [vmem:[%s4 + $0x160] sm:$0xff]
  %v342 = vld [vmem:[%s4 + $0x168] sm:$0xff]
  %v343 = vld [vmem:[%s4 + $0x170] sm:$0xff]
  %v344 = vld [vmem:[%s4 + $0x178] sm:$0xff]
  %v345 = vld [vmem:[%s4 + $0x180] sm:$0xff]
  %v346 = vld [vmem:[%s4 + $0x188] sm:$0xff]
  %v347 = vld [vmem:[%s4 + $0x190] sm:$0xff]
  %v348 = vld [vmem:[%s4 + $0x198] sm:$0xff]
  %v349 = vld [vmem:[%s4 + $0x1a0] sm:$0xff]
  %v350 = vld [vmem:[%s4 + $0x1a8] sm:$0xff]
  %v351 = vld [vmem:[%s4 + $0x1b0] sm:$0xff]
  %v352 = vld [vmem:[%s4 + $0x1b8] sm:$0xff]
  %v353 = vld [vmem:[%s4 + $0x1c0] sm:$0xff]
  %v354 = vld [vmem:[%s4 + $0x1c8] sm:$0xff]
  %v355 = vld [vmem:[%s4 + $0x1d0] sm:$0xff]
  %v356 = vld [vmem:[%s4 + $0x1d8] sm:$0xff]
  %v357 = vld [vmem:[%s4 + $0x1e0] sm:$0xff]
  %v358 = vld [vmem:[%s4 + $0x1e8] sm:$0xff]
  %v359 = vld [vmem:[%s4 + $0x1f0] sm:$0xff]
  %v360 = vld [vmem:[%s4 + $0x1f8] sm:$0xff]
  %361 = vmatpush.msra.mxu0 %v312
  %362 = vmatpush.msra.mxu0 %v311
  %363 = vmatpush.msra.mxu0 %v310
  %364 = vmatpush.msra.mxu0 %v309
  %365 = vmatpush.msra.mxu0 %v308
  %366 = vmatpush.msra.mxu0 %v307
  %367 = vmatpush.msra.mxu0 %v306
  %368 = vmatpush.msra.mxu0 %v305
  %369 = vmatpush.msra.mxu0 %v304
  %370 = vmatpush.msra.mxu0 %v303
  %371 = vmatpush.msra.mxu0 %v302
  %372 = vmatpush.msra.mxu0 %v301
  %373 = vmatpush.msra.mxu0 %v300
  %374 = vmatpush.msra.mxu0 %v299
  %375 = vmatpush.msra.mxu0 %v298
  %376 = vmatpush.msra.mxu0 %v297
  %377 = vmatmul.f32.gmra.mxu0 %v289
  %v378 = vpop.f32.mrf.mxu0
  %v379 = vadd.f32 0.0, %v378
  %380 = vmatmul.f32.gmra.mxu0 %v293
  %v381 = vpop.f32.mrf.mxu0
  %v382 = vadd.f32 0.0, %v381
  %383 = vdwg.mxu0
  %384 = vmatpush.msra.mxu0 %v328
  %385 = vmatpush.msra.mxu0 %v327
  %386 = vmatpush.msra.mxu0 %v326
  %387 = vmatpush.msra.mxu0 %v325
  %388 = vmatpush.msra.mxu0 %v324
  %389 = vmatpush.msra.mxu0 %v323
  %390 = vmatpush.msra.mxu0 %v322
  %391 = vmatpush.msra.mxu0 %v321
  %392 = vmatpush.msra.mxu0 %v320
  %393 = vmatpush.msra.mxu0 %v319
  %394 = vmatpush.msra.mxu0 %v318
  %395 = vmatpush.msra.mxu0 %v317
  %396 = vmatpush.msra.mxu0 %v316
  %397 = vmatpush.msra.mxu0 %v315
  %398 = vmatpush.msra.mxu0 %v314
  %399 = vmatpush.msra.mxu0 %v313
  %400 = vmatmul.f32.gmra.mxu0 %v290
  %v401 = vpop.f32.mrf.mxu0
  %v402 = vadd.f32 %v379, %v401
  %403 = vmatmul.f32.gmra.mxu0 %v294
  %v404 = vpop.f32.mrf.mxu0
  %v405 = vadd.f32 %v382, %v404
  %406 = vdwg.mxu0
  %407 = vmatpush.msra.mxu0 %v344
  %408 = vmatpush.msra.mxu0 %v343
  %409 = vmatpush.msra.mxu0 %v342
  %410 = vmatpush.msra.mxu0 %v341
  %411 = vmatpush.msra.mxu0 %v340
  %412 = vmatpush.msra.mxu0 %v339
  %413 = vmatpush.msra.mxu0 %v338
  %414 = vmatpush.msra.mxu0 %v337
  %415 = vmatpush.msra.mxu0 %v336
  %416 = vmatpush.msra.mxu0 %v335
  %417 = vmatpush.msra.mxu0 %v334
  %418 = vmatpush.msra.mxu0 %v333
  %419 = vmatpush.msra.mxu0 %v332
  %420 = vmatpush.msra.mxu0 %v331
  %421 = vmatpush.msra.mxu0 %v330
  %422 = vmatpush.msra.mxu0 %v329
  %423 = vmatmul.f32.gmra.mxu0 %v291
  %v424 = vpop.f32.mrf.mxu0
  %v425 = vadd.f32 %v402, %v424
  %426 = vmatmul.f32.gmra.mxu0 %v295
  %v427 = vpop.f32.mrf.mxu0
  %v428 = vadd.f32 %v405, %v427
  %429 = vdwg.mxu0
  %430 = vmatpush.msra.mxu0 %v360
  %431 = vmatpush.msra.mxu0 %v359
  %432 = vmatpush.msra.mxu0 %v358
  %433 = vmatpush.msra.mxu0 %v357
  %434 = vmatpush.msra.mxu0 %v356
  %435 = vmatpush.msra.mxu0 %v355
  %436 = vmatpush.msra.mxu0 %v354
  %437 = vmatpush.msra.mxu0 %v353
  %438 = vmatpush.msra.mxu0 %v352
  %439 = vmatpush.msra.mxu0 %v351
  %440 = vmatpush.msra.mxu0 %v350
  %441 = vmatpush.msra.mxu0 %v349
  %442 = vmatpush.msra.mxu0 %v348
  %443 = vmatpush.msra.mxu0 %v347
  %444 = vmatpush.msra.mxu0 %v346
  %445 = vmatpush.msra.mxu0 %v345
  %446 = vmatmul.f32.gmra.mxu0 %v292
  %v447 = vpop.f32.mrf.mxu0
  %v448 = vadd.f32 %v425, %v447
  %449 = vmatmul.f32.gmra.mxu0 %v296
  %v450 = vpop.f32.mrf.mxu0
  %v451 = vadd.f32 %v428, %v450
  %452 = vdwg.mxu0
  %vm453 = vcmp.gt.f32.partialorder %v22, 0.0
  %vm454 = vcmp.gt.f32.partialorder %v23, 0.0
  %v455 = vsel %vm453, %v448, -1e+30
  %v456 = vsel %vm454, %v451, -1e+30
  %vm457 = vcmask 130048
  %v458 = vsel %vm457, %v455, -inf
  %459 = vmax.xlane.f32.xlu0 %v458
  %v460 = vpop.xlane.xlu0 %459
  %v461 = vsel %vm457, %v456, -inf
  %462 = vmax.xlane.f32.xlu0 %v461
  %v463 = vpop.xlane.xlu0 %462
  %v464 = vsub.f32 %v455, %v460
  %v465 = vsub.f32 %v456, %v463
  %v466 = vmul.f32 %v464, 1.442695
  %v467 = vpow.pop %v466
  %v468 = vmul.f32 %v465, 1.442695
  %v469 = vpow.pop %v468
  %v470 = vsel %vm457, %v467, 0.0
  %471 = vadd.xlane.f32.xlu0 %v470
  %v472 = vpop.xlane.xlu0 %471
  %v473 = vsel %vm457, %v469, 0.0
  %474 = vadd.xlane.f32.xlu0 %v473
  %v475 = vpop.xlane.xlu0 %474
  %v476 = vrcp.pop %v472
  %v477 = vmul.f32 %v472, %v476
  %v478 = vsub.f32 1.0, %v477
  %v479 = vmul.f32 %v476, %v478
  %v480 = vadd.f32 %v476, %v479
  %vm481 = vweird.f32 %v472
  %vm482 = vweird.f32 %v476
  %vm483 = vmor %vm481, %vm482
  %v484 = vsel %vm483, %v476, %v480
  %v485 = vand.u32 2147483647, %v472
  %vm486 = vcmp.eq.f32.partialorder %v485, 8.507059e+37
  %v487 = vand.u32 %v472, 2147483648
  %v488 = vor.u32 1.1754944e-38, %v487
  %v489 = vsel %vm486, %v488, %v484
  %v490 = vmul.f32 %v467, %v489
  %v491 = vrcp.pop %v475
  %v492 = vmul.f32 %v475, %v491
  %v493 = vsub.f32 1.0, %v492
  %v494 = vmul.f32 %v491, %v493
  %v495 = vadd.f32 %v491, %v494
  %vm496 = vweird.f32 %v475
  %vm497 = vweird.f32 %v491
  %vm498 = vmor %vm496, %vm497
  %v499 = vsel %vm498, %v491, %v495
  %v500 = vand.u32 2147483647, %v475
  %vm501 = vcmp.eq.f32.partialorder %v500, 8.507059e+37
  %v502 = vand.u32 %v475, 2147483648
  %v503 = vor.u32 1.1754944e-38, %v502
  %v504 = vsel %vm501, %v503, %v499
  %v505 = vmul.f32 %v469, %v504
  %vm506 = vcmask 261248
  %v507 = vsel %vm506, %v455, -inf
  %508 = vmax.xlane.f32.xlu0 %v507
  %v509 = vpop.xlane.xlu0 %508
  %v510 = vsel %vm506, %v456, -inf
  %511 = vmax.xlane.f32.xlu0 %v510
  %v512 = vpop.xlane.xlu0 %511
  %v513 = vsub.f32 %v455, %v509
  %v514 = vsub.f32 %v456, %v512
  %v515 = vmul.f32 %v513, 1.442695
  %v516 = vpow.pop %v515
  %v517 = vmul.f32 %v514, 1.442695
  %v518 = vpow.pop %v517
  %521 = vrot.lane.b32.xlu0 %v516, 112
  %v522 = vpop.permute.xlu0 %521
  %523 = vrot.lane.b32.xlu0 %v518, 112
  %v524 = vpop.permute.xlu0 %523
  %v527 = vsel %vm457, %v522, 0.0
  %528 = vadd.xlane.f32.xlu0 %v527
  %v529 = vpop.xlane.xlu0 %528
  %v530 = vsel %vm457, %v524, 0.0
  %531 = vadd.xlane.f32.xlu0 %v530
  %v532 = vpop.xlane.xlu0 %531
  %v533 = vrcp.pop %v529
  %v534 = vmul.f32 %v529, %v533
  %v535 = vsub.f32 1.0, %v534
  %v536 = vmul.f32 %v533, %v535
  %v537 = vadd.f32 %v533, %v536
  %vm538 = vweird.f32 %v529
  %vm539 = vweird.f32 %v533
  %vm540 = vmor %vm538, %vm539
  %v541 = vsel %vm540, %v533, %v537
  %v542 = vand.u32 2147483647, %v529
  %vm543 = vcmp.eq.f32.partialorder %v542, 8.507059e+37
  %v544 = vand.u32 %v529, 2147483648
  %v545 = vor.u32 1.1754944e-38, %v544
  %v546 = vsel %vm543, %v545, %v541
  %v547 = vmul.f32 %v516, %v546
  %v548 = vrcp.pop %v532
  %v549 = vmul.f32 %v532, %v548
  %v550 = vsub.f32 1.0, %v549
  %v551 = vmul.f32 %v548, %v550
  %v552 = vadd.f32 %v548, %v551
  %vm553 = vweird.f32 %v532
  %vm554 = vweird.f32 %v548
  %vm555 = vmor %vm553, %vm554
  %v556 = vsel %vm555, %v548, %v552
  %v557 = vand.u32 2147483647, %v532
  %vm558 = vcmp.eq.f32.partialorder %v557, 8.507059e+37
  %v559 = vand.u32 %v532, 2147483648
  %v560 = vor.u32 1.1754944e-38, %v559
  %v561 = vsel %vm558, %v560, %v556
  %v562 = vmul.f32 %v518, %v561
  %vm563 = vcmask 392448
  %v564 = vsel %vm563, %v455, -inf
  %565 = vmax.xlane.f32.xlu0 %v564
  %v566 = vpop.xlane.xlu0 %565
  %v567 = vsel %vm563, %v456, -inf
  %568 = vmax.xlane.f32.xlu0 %v567
  %v569 = vpop.xlane.xlu0 %568
  %v570 = vsub.f32 %v455, %v566
  %v571 = vsub.f32 %v456, %v569
  %v572 = vmul.f32 %v570, 1.442695
  %v573 = vpow.pop %v572
  %v574 = vmul.f32 %v571, 1.442695
  %v575 = vpow.pop %v574
  %578 = vrot.lane.b32.xlu0 %v573, 96
  %v579 = vpop.permute.xlu0 %578
  %580 = vrot.lane.b32.xlu0 %v575, 96
  %v581 = vpop.permute.xlu0 %580
  %v584 = vsel %vm457, %v579, 0.0
  %585 = vadd.xlane.f32.xlu0 %v584
  %v586 = vpop.xlane.xlu0 %585
  %v587 = vsel %vm457, %v581, 0.0
  %588 = vadd.xlane.f32.xlu0 %v587
  %v589 = vpop.xlane.xlu0 %588
  %v590 = vrcp.pop %v586
  %v591 = vmul.f32 %v586, %v590
  %v592 = vsub.f32 1.0, %v591
  %v593 = vmul.f32 %v590, %v592
  %v594 = vadd.f32 %v590, %v593
  %vm595 = vweird.f32 %v586
  %vm596 = vweird.f32 %v590
  %vm597 = vmor %vm595, %vm596
  %v598 = vsel %vm597, %v590, %v594
  %v599 = vand.u32 2147483647, %v586
  %vm600 = vcmp.eq.f32.partialorder %v599, 8.507059e+37
  %v601 = vand.u32 %v586, 2147483648
  %v602 = vor.u32 1.1754944e-38, %v601
  %v603 = vsel %vm600, %v602, %v598
  %v604 = vmul.f32 %v573, %v603
  %v605 = vrcp.pop %v589
  %v606 = vmul.f32 %v589, %v605
  %v607 = vsub.f32 1.0, %v606
  %v608 = vmul.f32 %v605, %v607
  %v609 = vadd.f32 %v605, %v608
  %vm610 = vweird.f32 %v589
  %vm611 = vweird.f32 %v605
  %vm612 = vmor %vm610, %vm611
  %v613 = vsel %vm612, %v605, %v609
  %v614 = vand.u32 2147483647, %v589
  %vm615 = vcmp.eq.f32.partialorder %v614, 8.507059e+37
  %v616 = vand.u32 %v589, 2147483648
  %v617 = vor.u32 1.1754944e-38, %v616
  %v618 = vsel %vm615, %v617, %v613
  %v619 = vmul.f32 %v575, %v618
  %vm620 = vcmask 523648
  %v621 = vsel %vm620, %v455, -inf
  %622 = vmax.xlane.f32.xlu0 %v621
  %v623 = vpop.xlane.xlu0 %622
  %v624 = vsel %vm620, %v456, -inf
  %625 = vmax.xlane.f32.xlu0 %v624
  %v626 = vpop.xlane.xlu0 %625
  %v627 = vsub.f32 %v455, %v623
  %v628 = vsub.f32 %v456, %v626
  %v629 = vmul.f32 %v627, 1.442695
  %v630 = vpow.pop %v629
  %v631 = vmul.f32 %v628, 1.442695
  %v632 = vpow.pop %v631
  %635 = vrot.lane.b32.xlu0 %v630, 80
  %v636 = vpop.permute.xlu0 %635
  %637 = vrot.lane.b32.xlu0 %v632, 80
  %v638 = vpop.permute.xlu0 %637
  %v641 = vsel %vm457, %v636, 0.0
  %642 = vadd.xlane.f32.xlu0 %v641
  %v643 = vpop.xlane.xlu0 %642
  %v644 = vsel %vm457, %v638, 0.0
  %645 = vadd.xlane.f32.xlu0 %v644
  %v646 = vpop.xlane.xlu0 %645
  %v647 = vrcp.pop %v643
  %v648 = vmul.f32 %v643, %v647
  %v649 = vsub.f32 1.0, %v648
  %v650 = vmul.f32 %v647, %v649
  %v651 = vadd.f32 %v647, %v650
  %vm652 = vweird.f32 %v643
  %vm653 = vweird.f32 %v647
  %vm654 = vmor %vm652, %vm653
  %v655 = vsel %vm654, %v647, %v651
  %v656 = vand.u32 2147483647, %v643
  %vm657 = vcmp.eq.f32.partialorder %v656, 8.507059e+37
  %v658 = vand.u32 %v643, 2147483648
  %v659 = vor.u32 1.1754944e-38, %v658
  %v660 = vsel %vm657, %v659, %v655
  %v661 = vmul.f32 %v630, %v660
  %v662 = vrcp.pop %v646
  %v663 = vmul.f32 %v646, %v662
  %v664 = vsub.f32 1.0, %v663
  %v665 = vmul.f32 %v662, %v664
  %v666 = vadd.f32 %v662, %v665
  %vm667 = vweird.f32 %v646
  %vm668 = vweird.f32 %v662
  %vm669 = vmor %vm667, %vm668
  %v670 = vsel %vm669, %v662, %v666
  %v671 = vand.u32 2147483647, %v646
  %vm672 = vcmp.eq.f32.partialorder %v671, 8.507059e+37
  %v673 = vand.u32 %v646, 2147483648
  %v674 = vor.u32 1.1754944e-38, %v673
  %v675 = vsel %vm672, %v674, %v670
  %v676 = vmul.f32 %v632, %v675
  %v677 = vsel %vm457, %v490, %v547
  %v678 = vsel %vm457, %v505, %v562
  %v679 = vsel %vm246, %v677, %v604
  %v680 = vsel %vm246, %v678, %v619
  %vm681 = vcmask 392192
  %v682 = vsel %vm681, %v679, %v661
  %v683 = vsel %vm681, %v680, %v676
  %v684 = vld [vmem:[%s4 + $0x200] sm:$0xff]
  %v685 = vld [vmem:[%s4 + $0x208] sm:$0xff]
  %v686 = vld [vmem:[%s4 + $0x210] sm:$0xff]
  %v687 = vld [vmem:[%s4 + $0x218] sm:$0xff]
  %v688 = vld [vmem:[%s4 + $0x220] sm:$0xff]
  %v689 = vld [vmem:[%s4 + $0x228] sm:$0xff]
  %v690 = vld [vmem:[%s4 + $0x230] sm:$0xff]
  %v691 = vld [vmem:[%s4 + $0x238] sm:$0xff]
  %700 = vrot.lane.b32.xlu0 %v684, 112
  %v701 = vpop.permute.xlu0 %700
  %702 = vrot.lane.b32.xlu0 %v685, 112
  %v703 = vpop.permute.xlu0 %702
  %704 = vrot.lane.b32.xlu0 %v686, 112
  %v705 = vpop.permute.xlu0 %704
  %706 = vrot.lane.b32.xlu0 %v687, 112
  %v707 = vpop.permute.xlu0 %706
  %708 = vrot.lane.b32.xlu0 %v688, 112
  %v709 = vpop.permute.xlu0 %708
  %710 = vrot.lane.b32.xlu0 %v689, 112
  %v711 = vpop.permute.xlu0 %710
  %712 = vrot.lane.b32.xlu0 %v690, 112
  %v713 = vpop.permute.xlu0 %712
  %714 = vrot.lane.b32.xlu0 %v691, 112
  %v715 = vpop.permute.xlu0 %714
  %v724 = vmul.f32 %v164, %v701
  %v725 = vmul.f32 %v167, %v703
  %v726 = vmul.f32 %v164, %v705
  %v727 = vmul.f32 %v167, %v707
  %v728 = vmul.f32 %v164, %v709
  %v729 = vmul.f32 %v167, %v711
  %v730 = vmul.f32 %v164, %v713
  %v731 = vmul.f32 %v167, %v715
  %v732 = vld [vmem:[%s4 + $0x248] sm:$0x1]
  %v733 = vperm.slane %v732, 0
  %735 = vrot.lane.b32.xlu0 %v733, 112
  %v736 = vpop.permute.xlu0 %735
  %v739 = vsel %vm248, %v682, 0
  %v742 = vsel %vm248, %v683, 0
  %744 = vmatpush.msra.mxu0 0.0
  %745 = vmatpush.msra.mxu0 0.0
  %746 = vmatpush.msra.mxu0 0.0
  %747 = vmatpush.msra.mxu0 0.0
  %748 = vmatpush.msra.mxu0 0.0
  %749 = vmatpush.msra.mxu0 0.0
  %750 = vmatpush.msra.mxu0 0.0
  %751 = vmatpush.msra.mxu0 0.0
  %752 = vmatpush.msra.mxu0 %v731
  %753 = vmatpush.msra.mxu0 %v730
  %754 = vmatpush.msra.mxu0 %v729
  %755 = vmatpush.msra.mxu0 %v728
  %756 = vmatpush.msra.mxu0 %v727
  %757 = vmatpush.msra.mxu0 %v726
  %758 = vmatpush.msra.mxu0 %v725
  %759 = vmatpush.msra.mxu0 %v724
  %760 = vmatmul.f32.gmra.mxu0 %v739
  %v761 = vpop.f32.mrf.mxu0
  %v762 = vadd.f32 %v736, %v761
  %763 = vmatmul.f32.gmra.mxu0 %v742
  %v764 = vpop.f32.mrf.mxu0
  %v765 = vadd.f32 %v736, %v764
  %766 = vdwg.mxu0
  %v767 = vld [vmem:[%s4 + $0x249] sm:$0x1]
  %v768 = vld [vmem:[%s4 + $0x24a] sm:$0x1]
  %v769 = vsel %vm246, %v762, 0.0
  %770 = vadd.xlane.f32.xlu0 %v769
  %v771 = vpop.xlane.xlu0 %770
  %v772 = vsel %vm246, %v765, 0.0
  %773 = vadd.xlane.f32.xlu0 %v772
  %v774 = vpop.xlane.xlu0 %773
  %v775 = vrcp.pop 32.0
  %v776 = vmul.f32 32.0, %v775
  %v777 = vsub.f32 1.0, %v776
  %v778 = vmul.f32 %v775, %v777
  %v779 = vadd.f32 %v775, %v778
  %vm780 = vweird.f32 %v775
  %v781 = vsel %vm780, %v775, %v779
  %v782 = vmul.f32 %v771, %v781
  %v783 = vmul.f32 %v774, %v781
  %v784 = vsub.f32 %v762, %v782
  %v785 = vsub.f32 %v765, %v783
  %v786 = vmul.f32 %v784, %v784
  %v787 = vmul.f32 %v785, %v785
  %v788 = vsel %vm246, %v786, 0.0
  %789 = vadd.xlane.f32.xlu0 %v788
  %v790 = vpop.xlane.xlu0 %789
  %v791 = vsel %vm246, %v787, 0.0
  %792 = vadd.xlane.f32.xlu0 %v791
  %v793 = vpop.xlane.xlu0 %792
  %v794 = vmul.f32 %v790, %v781
  %v795 = vmul.f32 %v793, %v781
  %v796 = vadd.f32 %v794, 1e-05
  %v797 = vadd.f32 %v795, 1e-05
  %v798 = vrsqrt.pop %v796
  %v799 = vmul.f32 %v798, %v796
  %v800 = vmul.f32 %v799, %v798
  %v801 = vmul.f32 0.5, %v800
  %v802 = vsub.f32 1.5, %v801
  %v803 = vmul.f32 %v798, %v802
  %vm804 = vweird.f32 %v796
  %vm805 = vweird.f32 %v798
  %vm806 = vmor %vm804, %vm805
  %v807 = vsel %vm806, %v798, %v803
  %v808 = vrsqrt.pop %v797
  %v809 = vmul.f32 %v808, %v797
  %v810 = vmul.f32 %v809, %v808
  %v811 = vmul.f32 0.5, %v810
  %v812 = vsub.f32 1.5, %v811
  %v813 = vmul.f32 %v808, %v812
  %vm814 = vweird.f32 %v797
  %vm815 = vweird.f32 %v808
  %vm816 = vmor %vm814, %vm815
  %v817 = vsel %vm816, %v808, %v813
  %v818 = vmul.f32 %v784, %v807
  %v819 = vmul.f32 %v785, %v817
  %v820 = vperm.slane %v767, 0
  %822 = vrot.lane.b32.xlu0 %v820, 112
  %v823 = vpop.permute.xlu0 %822
  %v825 = vmul.f32 %v818, %v823
  %v826 = vmul.f32 %v819, %v823
  %v827 = vperm.slane %v768, 0
  %829 = vrot.lane.b32.xlu0 %v827, 112
  %v830 = vpop.permute.xlu0 %829
  %v832 = vadd.f32 %v825, %v830
  %v833 = vadd.f32 %v826, %v830
  %v834 = vadd.f32 %v832, %v187
  %v835 = vadd.f32 %v833, %v190
  %vm836 = vcmp.gt.f32.partialorder %v834, 0.0
  %vm837 = vcmp.gt.f32.partialorder %v835, 0.0
  %v838 = vmin.f32 %v834, 0.0
  %v839 = vmin.f32 %v835, 0.0
  %v840 = vmul.f32 %v838, 1.442695
  %v841 = vpow.pop %v840
  %v842 = vmul.f32 %v839, 1.442695
  %v843 = vpow.pop %v842
  %v844 = vsub.f32 %v841, 1.0
  %v845 = vsub.f32 %v843, 1.0
  %v846 = vsel %vm836, %v834, %v844
  %v847 = vsel %vm837, %v835, %v845
  %v848 = vld [vmem:[%s3] sm:$0xff]
  %v849 = vld [vmem:[%s3 + $0x8] sm:$0xff]
  %v850 = vld [vmem:[%s3 + $0x10] sm:$0xff]
  %v851 = vld [vmem:[%s3 + $0x18] sm:$0xff]
  %v852 = vld [vmem:[%s3 + $0x20] sm:$0xff]
  %v853 = vld [vmem:[%s3 + $0x28] sm:$0xff]
  %v854 = vld [vmem:[%s3 + $0x30] sm:$0xff]
  %v855 = vld [vmem:[%s3 + $0x38] sm:$0xff]
  %s856 = scalar_lea.vmem %s3, 64
  %v857 = vld [vmem:[%s856] ss:$8 sm:$0x3]
  %v859 = vperm.slane %v857, 0
  %v860 = vperm.slane %v857, 1
  %v864 = vsel %vm246, %v846, 0
  %v867 = vsel %vm246, %v847, 0
  %869 = vmatpush.msra.mxu0 0.0
  %870 = vmatpush.msra.mxu0 0.0
  %871 = vmatpush.msra.mxu0 0.0
  %872 = vmatpush.msra.mxu0 0.0
  %873 = vmatpush.msra.mxu0 0.0
  %874 = vmatpush.msra.mxu0 0.0
  %875 = vmatpush.msra.mxu0 0.0
  %876 = vmatpush.msra.mxu0 0.0
  %877 = vmatpush.msra.mxu0 0.0
  %878 = vmatpush.msra.mxu0 0.0
  %879 = vmatpush.msra.mxu0 0.0
  %880 = vmatpush.msra.mxu0 0.0
  %881 = vmatpush.msra.mxu0 %v854
  %882 = vmatpush.msra.mxu0 %v852
  %883 = vmatpush.msra.mxu0 %v850
  %884 = vmatpush.msra.mxu0 %v848
  %885 = vmatmul.f32.gmra.mxu0 %v864
  %v886 = vpop.f32.mrf.mxu0
  %v887 = vadd.f32 %v859, %v886
  %888 = vmatmul.f32.gmra.mxu0 %v867
  %v889 = vpop.f32.mrf.mxu0
  %v890 = vadd.f32 %v859, %v889
  %891 = vdwg.mxu0
  %892 = vmatpush.msra.mxu0 0.0
  %893 = vmatpush.msra.mxu0 0.0
  %894 = vmatpush.msra.mxu0 0.0
  %895 = vmatpush.msra.mxu0 0.0
  %896 = vmatpush.msra.mxu0 0.0
  %897 = vmatpush.msra.mxu0 0.0
  %898 = vmatpush.msra.mxu0 0.0
  %899 = vmatpush.msra.mxu0 0.0
  %900 = vmatpush.msra.mxu0 0.0
  %901 = vmatpush.msra.mxu0 0.0
  %902 = vmatpush.msra.mxu0 0.0
  %903 = vmatpush.msra.mxu0 0.0
  %904 = vmatpush.msra.mxu0 %v855
  %905 = vmatpush.msra.mxu0 %v853
  %906 = vmatpush.msra.mxu0 %v851
  %907 = vmatpush.msra.mxu0 %v849
  %908 = vmatmul.f32.gmra.mxu0 %v864
  %v909 = vpop.f32.mrf.mxu0
  %v910 = vadd.f32 %v860, %v909
  %911 = vmatmul.f32.gmra.mxu0 %v867
  %v912 = vpop.f32.mrf.mxu0
  %v913 = vadd.f32 %v860, %v912
  %914 = vdwg.mxu0
  %v916 = vrot.slane %v910, 1
  %917 = vrot.lane.b32.xlu0 %v916, 8
  %v918 = vpop.permute.xlu0 %917
  %v920 = vrot.slane %v910, 2
  %921 = vrot.lane.b32.xlu0 %v920, 16
  %v922 = vpop.permute.xlu0 %921
  %v924 = vrot.slane %v910, 3
  %925 = vrot.lane.b32.xlu0 %v924, 24
  %v926 = vpop.permute.xlu0 %925
  %v928 = vrot.slane %v910, 4
  %929 = vrot.lane.b32.xlu0 %v928, 32
  %v930 = vpop.permute.xlu0 %929
  %v932 = vrot.slane %v910, 5
  %933 = vrot.lane.b32.xlu0 %v932, 40
  %v934 = vpop.permute.xlu0 %933
  %v936 = vrot.slane %v910, 6
  %937 = vrot.lane.b32.xlu0 %v936, 48
  %v938 = vpop.permute.xlu0 %937
  %v940 = vrot.slane %v910, 7
  %941 = vrot.lane.b32.xlu0 %v940, 56
  %v942 = vpop.permute.xlu0 %941
  %945 = vrot.lane.b32.xlu0 %v913, 64
  %v946 = vpop.permute.xlu0 %945
  %v948 = vrot.slane %v913, 1
  %949 = vrot.lane.b32.xlu0 %v948, 72
  %v950 = vpop.permute.xlu0 %949
  %v952 = vrot.slane %v913, 2
  %953 = vrot.lane.b32.xlu0 %v952, 80
  %v954 = vpop.permute.xlu0 %953
  %v956 = vrot.slane %v913, 3
  %957 = vrot.lane.b32.xlu0 %v956, 88
  %v958 = vpop.permute.xlu0 %957
  %v960 = vrot.slane %v913, 4
  %961 = vrot.lane.b32.xlu0 %v960, 96
  %v962 = vpop.permute.xlu0 %961
  %v964 = vrot.slane %v913, 5
  %965 = vrot.lane.b32.xlu0 %v964, 104
  %v966 = vpop.permute.xlu0 %965
  %v968 = vrot.slane %v913, 6
  %969 = vrot.lane.b32.xlu0 %v968, 112
  %v970 = vpop.permute.xlu0 %969
  %v972 = vrot.slane %v913, 7
  %973 = vrot.lane.b32.xlu0 %v972, 120
  %v974 = vpop.permute.xlu0 %973
  %v976 = vsel %vm47, %v910, %v918
  %v977 = vsel %vm457, %v976, %v922
  %vm978 = vcmask 195584
  %v979 = vsel %vm978, %v977, %v926
  %v980 = vsel %vm246, %v979, %v930
  %vm981 = vcmask 326656
  %v982 = vsel %vm981, %v980, %v934
  %v983 = vsel %vm681, %v982, %v938
  %vm984 = vcmask 457728
  %v985 = vsel %vm984, %v983, %v942
  %v986 = vsel %vm248, %v985, %v946
  %vm987 = vcmask 588800
  %v988 = vsel %vm987, %v986, %v950
  %vm989 = vcmask 654336
  %v990 = vsel %vm989, %v988, %v954
  %vm991 = vcmask 719872
  %v992 = vsel %vm991, %v990, %v958
  %v993 = vsel %vm250, %v992, %v962
  %vm994 = vcmask 850944
  %v995 = vsel %vm994, %v993, %v966
  %vm996 = vcmask 916480
  %v997 = vsel %vm996, %v995, %v970
  %vm998 = vcmask 982016
  %v999 = vsel %vm998, %v997, %v974
  %v1000 = vperm.slane %v999, 0
  %v1001 = vadd.f32 %v887, %v1000
  %v1002 = vadd.f32 %v890, %v1000
  %vm1003 = vcmp.gt.f32.partialorder %v1001, 0.0
  %vm1004 = vcmp.gt.f32.partialorder %v1002, 0.0
  %v1005 = vmul.f32 %v1001, 0.2
  %v1006 = vmul.f32 %v1002, 0.2
  %v1007 = vsel %vm1003, %v1001, %v1005
  %v1008 = vsel %vm1004, %v1002, %v1006
  %v1009 = vld [vmem:[%s4 + $0x200] sm:$0xff]
  %v1010 = vld [vmem:[%s4 + $0x208] sm:$0xff]
  %v1011 = vld [vmem:[%s4 + $0x210] sm:$0xff]
  %v1012 = vld [vmem:[%s4 + $0x218] sm:$0xff]
  %v1013 = vld [vmem:[%s4 + $0x220] sm:$0xff]
  %v1014 = vld [vmem:[%s4 + $0x228] sm:$0xff]
  %v1015 = vld [vmem:[%s4 + $0x230] sm:$0xff]
  %v1016 = vld [vmem:[%s4 + $0x238] sm:$0xff]
  %v1017 = vld [vmem:[%s4 + $0x240] sm:$0xff]
  %v1018 = vld [vmem:[%s4 + $0x248] sm:$0xff]
  %v1019 = vld [vmem:[%s4 + $0x250] sm:$0xff]
  %v1020 = vld [vmem:[%s4 + $0x258] sm:$0xff]
  %v1021 = vld [vmem:[%s4 + $0x260] sm:$0xff]
  %v1022 = vld [vmem:[%s4 + $0x268] sm:$0xff]
  %v1023 = vld [vmem:[%s4 + $0x270] sm:$0xff]
  %v1024 = vld [vmem:[%s4 + $0x278] sm:$0xff]
  %1025 = vmatpush.msra.mxu0 %v1024
  %1026 = vmatpush.msra.mxu0 %v1023
  %1027 = vmatpush.msra.mxu0 %v1022
  %1028 = vmatpush.msra.mxu0 %v1021
  %1029 = vmatpush.msra.mxu0 %v1020
  %1030 = vmatpush.msra.mxu0 %v1019
  %1031 = vmatpush.msra.mxu0 %v1018
  %1032 = vmatpush.msra.mxu0 %v1017
  %1033 = vmatpush.msra.mxu0 %v1016
  %1034 = vmatpush.msra.mxu0 %v1015
  %1035 = vmatpush.msra.mxu0 %v1014
  %1036 = vmatpush.msra.mxu0 %v1013
  %1037 = vmatpush.msra.mxu0 %v1012
  %1038 = vmatpush.msra.mxu0 %v1011
  %1039 = vmatpush.msra.mxu0 %v1010
  %1040 = vmatpush.msra.mxu0 %v1009
  %1041 = vmatmul.f32.gmra.mxu0 %v1007
  %v1042 = vpop.f32.mrf.mxu0
  %v1043 = vadd.f32 0.0, %v1042
  %1044 = vmatmul.f32.gmra.mxu0 %v1008
  %v1045 = vpop.f32.mrf.mxu0
  %v1046 = vadd.f32 0.0, %v1045
  %1047 = vdwg.mxu0
  %v1048 = vsel %vm453, %v1043, -1e+30
  %v1049 = vsel %vm454, %v1046, -1e+30
  %v1050 = vsel %vm457, %v1048, -inf
  %1051 = vmax.xlane.f32.xlu0 %v1050
  %v1052 = vpop.xlane.xlu0 %1051
  %v1053 = vsel %vm457, %v1049, -inf
  %1054 = vmax.xlane.f32.xlu0 %v1053
  %v1055 = vpop.xlane.xlu0 %1054
  %v1056 = vsub.f32 %v1048, %v1052
  %v1057 = vsub.f32 %v1049, %v1055
  %v1058 = vmul.f32 %v1056, 1.442695
  %v1059 = vpow.pop %v1058
  %v1060 = vmul.f32 %v1057, 1.442695
  %v1061 = vpow.pop %v1060
  %v1062 = vsel %vm457, %v1059, 0.0
  %1063 = vadd.xlane.f32.xlu0 %v1062
  %v1064 = vpop.xlane.xlu0 %1063
  %v1065 = vsel %vm457, %v1061, 0.0
  %1066 = vadd.xlane.f32.xlu0 %v1065
  %v1067 = vpop.xlane.xlu0 %1066
  %v1068 = vrcp.pop %v1064
  %v1069 = vmul.f32 %v1064, %v1068
  %v1070 = vsub.f32 1.0, %v1069
  %v1071 = vmul.f32 %v1068, %v1070
  %v1072 = vadd.f32 %v1068, %v1071
  %vm1073 = vweird.f32 %v1064
  %vm1074 = vweird.f32 %v1068
  %vm1075 = vmor %vm1073, %vm1074
  %v1076 = vsel %vm1075, %v1068, %v1072
  %v1077 = vand.u32 2147483647, %v1064
  %vm1078 = vcmp.eq.f32.partialorder %v1077, 8.507059e+37
  %v1079 = vand.u32 %v1064, 2147483648
  %v1080 = vor.u32 1.1754944e-38, %v1079
  %v1081 = vsel %vm1078, %v1080, %v1076
  %v1082 = vmul.f32 %v1059, %v1081
  %v1083 = vrcp.pop %v1067
  %v1084 = vmul.f32 %v1067, %v1083
  %v1085 = vsub.f32 1.0, %v1084
  %v1086 = vmul.f32 %v1083, %v1085
  %v1087 = vadd.f32 %v1083, %v1086
  %vm1088 = vweird.f32 %v1067
  %vm1089 = vweird.f32 %v1083
  %vm1090 = vmor %vm1088, %vm1089
  %v1091 = vsel %vm1090, %v1083, %v1087
  %v1092 = vand.u32 2147483647, %v1067
  %vm1093 = vcmp.eq.f32.partialorder %v1092, 8.507059e+37
  %v1094 = vand.u32 %v1067, 2147483648
  %v1095 = vor.u32 1.1754944e-38, %v1094
  %v1096 = vsel %vm1093, %v1095, %v1091
  %v1097 = vmul.f32 %v1061, %v1096
  %v1098 = vld [vmem:[%s4 + $0x24b] sm:$0x1]
  %v1099 = vperm.slane %v1098, 0
  %1101 = vrot.lane.b32.xlu0 %v1099, 112
  %v1102 = vpop.permute.xlu0 %1101
  %v1105 = vsel %vm457, %v1082, 0
  %v1108 = vsel %vm457, %v1097, 0
  %1110 = vmatpush.msra.mxu0 0.0
  %1111 = vmatpush.msra.mxu0 0.0
  %1112 = vmatpush.msra.mxu0 0.0
  %1113 = vmatpush.msra.mxu0 0.0
  %1114 = vmatpush.msra.mxu0 0.0
  %1115 = vmatpush.msra.mxu0 0.0
  %1116 = vmatpush.msra.mxu0 0.0
  %1117 = vmatpush.msra.mxu0 0.0
  %1118 = vmatpush.msra.mxu0 0.0
  %1119 = vmatpush.msra.mxu0 0.0
  %1120 = vmatpush.msra.mxu0 0.0
  %1121 = vmatpush.msra.mxu0 0.0
  %1122 = vmatpush.msra.mxu0 0.0
  %1123 = vmatpush.msra.mxu0 0.0
  %1124 = vmatpush.msra.mxu0 %v913
  %1125 = vmatpush.msra.mxu0 %v910
  %1126 = vmatmul.f32.gmra.mxu0 %v1105
  %v1127 = vpop.f32.mrf.mxu0
  %v1128 = vadd.f32 %v1102, %v1127
  %1129 = vmatmul.f32.gmra.mxu0 %v1108
  %v1130 = vpop.f32.mrf.mxu0
  %v1131 = vadd.f32 %v1102, %v1130
  %1132 = vdwg.mxu0
  %v1133 = vld [vmem:[%s4 + $0x24c] sm:$0x1]
  %v1134 = vld [vmem:[%s4 + $0x24d] sm:$0x1]
  %v1135 = vsel %vm47, %v1128, 0.0
  %1136 = vadd.xlane.f32.xlu0 %v1135
  %v1137 = vpop.xlane.xlu0 %1136
  %v1138 = vsel %vm47, %v1131, 0.0
  %1139 = vadd.xlane.f32.xlu0 %v1138
  %v1140 = vpop.xlane.xlu0 %1139
  %v1141 = vrcp.pop 8.0
  %v1142 = vmul.f32 8.0, %v1141
  %v1143 = vsub.f32 1.0, %v1142
  %v1144 = vmul.f32 %v1141, %v1143
  %v1145 = vadd.f32 %v1141, %v1144
  %vm1146 = vweird.f32 %v1141
  %v1147 = vsel %vm1146, %v1141, %v1145
  %v1148 = vmul.f32 %v1137, %v1147
  %v1149 = vmul.f32 %v1140, %v1147
  %v1150 = vsub.f32 %v1128, %v1148
  %v1151 = vsub.f32 %v1131, %v1149
  %v1152 = vmul.f32 %v1150, %v1150
  %v1153 = vmul.f32 %v1151, %v1151
  %v1154 = vsel %vm47, %v1152, 0.0
  %1155 = vadd.xlane.f32.xlu0 %v1154
  %v1156 = vpop.xlane.xlu0 %1155
  %v1157 = vsel %vm47, %v1153, 0.0
  %1158 = vadd.xlane.f32.xlu0 %v1157
  %v1159 = vpop.xlane.xlu0 %1158
  %v1160 = vmul.f32 %v1156, %v1147
  %v1161 = vmul.f32 %v1159, %v1147
  %v1162 = vadd.f32 %v1160, 1e-05
  %v1163 = vadd.f32 %v1161, 1e-05
  %v1164 = vrsqrt.pop %v1162
  %v1165 = vmul.f32 %v1164, %v1162
  %v1166 = vmul.f32 %v1165, %v1164
  %v1167 = vmul.f32 0.5, %v1166
  %v1168 = vsub.f32 1.5, %v1167
  %v1169 = vmul.f32 %v1164, %v1168
  %vm1170 = vweird.f32 %v1162
  %vm1171 = vweird.f32 %v1164
  %vm1172 = vmor %vm1170, %vm1171
  %v1173 = vsel %vm1172, %v1164, %v1169
  %v1174 = vrsqrt.pop %v1163
  %v1175 = vmul.f32 %v1174, %v1163
  %v1176 = vmul.f32 %v1175, %v1174
  %v1177 = vmul.f32 0.5, %v1176
  %v1178 = vsub.f32 1.5, %v1177
  %v1179 = vmul.f32 %v1174, %v1178
  %vm1180 = vweird.f32 %v1163
  %vm1181 = vweird.f32 %v1174
  %vm1182 = vmor %vm1180, %vm1181
  %v1183 = vsel %vm1182, %v1174, %v1179
  %v1184 = vmul.f32 %v1150, %v1173
  %v1185 = vmul.f32 %v1151, %v1183
  %v1186 = vperm.slane %v1133, 0
  %1188 = vrot.lane.b32.xlu0 %v1186, 112
  %v1189 = vpop.permute.xlu0 %1188
  %v1191 = vmul.f32 %v1184, %v1189
  %v1192 = vmul.f32 %v1185, %v1189
  %v1193 = vperm.slane %v1134, 0
  %1195 = vrot.lane.b32.xlu0 %v1193, 112
  %v1196 = vpop.permute.xlu0 %1195
  %v1198 = vadd.f32 %v1191, %v1196
  %v1199 = vadd.f32 %v1192, %v1196
  %1200 = vrot.lane.b32.xlu0 %v910, 120
  %v1201 = vpop.permute.xlu0 %1200
  %1202 = vrot.lane.b32.xlu0 %v913, 120
  %v1203 = vpop.permute.xlu0 %1202
  %v1206 = vadd.f32 %v1198, %v1201
  %v1207 = vadd.f32 %v1199, %v1203
  %vm1208 = vcmp.gt.f32.partialorder %v1206, 0.0
  %vm1209 = vcmp.gt.f32.partialorder %v1207, 0.0
  %v1210 = vmin.f32 %v1206, 0.0
  %v1211 = vmin.f32 %v1207, 0.0
  %v1212 = vmul.f32 %v1210, 1.442695
  %v1213 = vpow.pop %v1212
  %v1214 = vmul.f32 %v1211, 1.442695
  %v1215 = vpow.pop %v1214
  %v1216 = vsub.f32 %v1213, 1.0
  %v1217 = vsub.f32 %v1215, 1.0
  %v1218 = vsel %vm1208, %v1206, %v1216
  %v1219 = vsel %vm1209, %v1207, %v1217
  %1220 = vrot.lane.b32.xlu0 %v910, 112
  %v1221 = vpop.permute.xlu0 %1220
  %1222 = vrot.lane.b32.xlu0 %v913, 112
  %v1223 = vpop.permute.xlu0 %1222
  %v1226 = vadd.f32 %v1218, %v1221
  %v1227 = vadd.f32 %v1219, %v1223
  %v1228 = vld [vmem:[%s4 + $0x240] sm:$0xff]
  %v1229 = vld [vmem:[%s4 + $0x24e] sm:$0x1]
  %v1230 = vperm.slane %v1229, 0
  %1232 = vrot.lane.b32.xlu0 %v1228, 112
  %v1233 = vpop.permute.xlu0 %1232
  %1236 = vrot.lane.b32.xlu0 %v1230, 112
  %v1237 = vpop.permute.xlu0 %1236
  %v1240 = vsel %vm47, %v1226, 0
  %v1243 = vsel %vm47, %v1227, 0
  %1245 = vmatpush.msra.mxu0 0.0
  %1246 = vmatpush.msra.mxu0 0.0
  %1247 = vmatpush.msra.mxu0 0.0
  %1248 = vmatpush.msra.mxu0 0.0
  %1249 = vmatpush.msra.mxu0 0.0
  %1250 = vmatpush.msra.mxu0 0.0
  %1251 = vmatpush.msra.mxu0 0.0
  %1252 = vmatpush.msra.mxu0 0.0
  %1253 = vmatpush.msra.mxu0 0.0
  %1254 = vmatpush.msra.mxu0 0.0
  %1255 = vmatpush.msra.mxu0 0.0
  %1256 = vmatpush.msra.mxu0 0.0
  %1257 = vmatpush.msra.mxu0 0.0
  %1258 = vmatpush.msra.mxu0 0.0
  %1259 = vmatpush.msra.mxu0 0.0
  %1260 = vmatpush.msra.mxu0 %v1233
  %1261 = vmatmul.f32.gmra.mxu0 %v1240
  %v1262 = vpop.f32.mrf.mxu0
  %v1263 = vadd.f32 %v1237, %v1262
  %1264 = vmatmul.f32.gmra.mxu0 %v1243
  %v1265 = vpop.f32.mrf.mxu0
  %v1266 = vadd.f32 %v1237, %v1265
  %1267 = vdwg.mxu0
  %vm1268 = vcmask 31744
  %1269 = vst.msk [vmem:[%s5] sm:$0xff] %vm1268, %v1263
  %1270 = vst.msk [vmem:[%s5 + $0x8] sm:$0xff] %vm1268, %v1266
  // Predicated region
  $region22: #{gat_model_forward.1} parent=0 // pred_check
    _
  $region23: #{gat_model_forward.1} parent=0 // pred_check_branch
    %1272 = sbr.rel (0) target = $region25
  $region24: #{gat_model_forward.1} parent=0 // pred_region
    _
  $region25: #{gat_model_forward.1} parent=0 // pred_fallthru
    _
  // Predicated region
  $region26: #{gat_model_forward.1} parent=0 // pred_check
    _
  $region27: #{gat_model_forward.1} parent=0 // pred_check_branch
    %1274 = sbr.rel (0) target = $region29
  $region28: #{gat_model_forward.1} parent=0 // pred_region
    _
  $region29: #{gat_model_forward.1} parent=0 // pred_fallthru
    _

</llo_original>
